<compile_context>
chip_gen: v6e
topology: v6e:2x2x1
jax: 0.10.0
libtpu: 0.0.40
codegen_flags: <defaults>
</compile_context>

<pallas_src>
import functools
import math

import jax
import jax.numpy as jnp
from jax.experimental import pallas as pl
from jax.experimental.pallas import tpu as pltpu


_MASK_NEG = -1e30  # finite "minus infinity": keeps fully-masked (padded) rows NaN-free


# ---------------------------------------------------------------------------
# VMEM planning helpers (lane-padding + generation aware)
# ---------------------------------------------------------------------------
def _round_up(x, m):
    return ((x + m - 1) // m) * m


def _padded_bytes(shape, itemsize):
    """VMEM footprint of a tile: last dim padded to 128 lanes, 2nd-to-last to the
    sublane multiple of the dtype (8 for 4-byte, 16 for 2-byte)."""
    s = list(shape)
    if not s:
        return itemsize
    if len(s) == 1:
        s = [1] + s
    sub = 8 * max(1, 4 // itemsize)
    s[-1] = _round_up(s[-1], 128)
    s[-2] = _round_up(s[-2], sub)
    n = itemsize
    for d in s:
        n *= d
    return n


@functools.lru_cache(maxsize=None)
def _vmem_config():
    """(block-planning budget, scoped vmem_limit_bytes) for the current TPU generation."""
    cap = None
    try:
        cap = getattr(pltpu.get_tpu_info(), "vmem_capacity_bytes", None)
    except Exception:
        cap = None
    if not cap:
        cap = 64 * 1024 * 1024                         # conservative (v7x-sized) fallback
    limit = int(min(cap // 2, 64 * 1024 * 1024))       # v5e/v6e -> 64 MiB, v7x -> 32 MiB
    limit = max(limit, 16 * 1024 * 1024)
    budget = int(limit * 0.7)                          # headroom for compiler scratch
    return budget, limit


@functools.lru_cache(maxsize=None)
def _min_grid_steps():
    """Prefer >= #TensorCores grid steps so 'parallel' axes can feed every core."""
    try:
        dev = jax.devices()[0]
        for attr in ("num_cores", "core_count"):
            v = getattr(dev, attr, None)
            if isinstance(v, int) and v > 0:
                return max(1, v)
    except Exception:
        pass
    return 2   # safe default (v7x has 2 TCs; elsewhere costs at most one ~0.35us extra step)


def _group_candidates(bh, min_steps, max_group=16):
    divs = [d for d in range(1, min(bh, max_group) + 1) if bh % d == 0]
    pref = [d for d in divs if bh // d >= min_steps]
    return sorted(pref if pref else divs, reverse=True)


# ---------------------------------------------------------------------------
# Kernel 1: ProbSparse query metric  M = max_s(QK_sample) - mean_s(QK_sample)
# Grid: (head groups [parallel], L_K tiles [arbitrary]).  Running max / weighted
# sum live in VMEM scratch; output is a lane-dense (G, 1, L_Q) block.
# ---------------------------------------------------------------------------
def _plan_metric(bh, l_q, l_k, d, io_sz, budget, min_steps):
    tile_opts = [l_k] + [t for t in (1024, 512, 256, 128) if t < l_k and l_k % t == 0]
    for g in _group_candidates(bh, min_steps):
        for tk in tile_opts:
            need = (2 * _padded_bytes((g, l_q, d), io_sz)        # Q block (x2 buffers)
                    + 2 * _padded_bytes((g, tk, d), io_sz)       # K tile
                    + 4 * _padded_bytes((l_q, tk), io_sz)        # count + additive-mask tiles
                    + 2 * _padded_bytes((g, 1, l_q), 4)          # M output
                    + 4 * _padded_bytes((g, l_q), 4)             # running max / sum scratch
                    + 2 * _padded_bytes((g, l_q, tk), 4))        # scores intermediate (+slack)
            if need <= budget:
                return g, tk
    return 1, tile_opts[-1]


def _metric_kernel(q_ref, k_ref, cnt_ref, neg_ref, m_ref, max_sc, sum_sc, *, inv_sample_k):
    kt = pl.program_id(1)

    @pl.when(kt == 0)
    def _():
        max_sc[...] = jnp.full(max_sc.shape, -jnp.inf, max_sc.dtype)
        sum_sc[...] = jnp.zeros(sum_sc.shape, sum_sc.dtype)

    scores = jnp.einsum('gqd,gkd->gqk', q_ref[...], k_ref[...],
                        preferred_element_type=jnp.float32)            # MXU (bf16 ops if use_bf16)
    tile_max = jnp.max(scores + neg_ref[...][None, :, :], axis=-1)     # additive 0/-1e30 mask
    tile_sum = jnp.sum(scores * cnt_ref[...][None, :, :], axis=-1)     # sample multiplicity
    max_sc[...] = jnp.maximum(max_sc[...], tile_max)
    sum_sc[...] = sum_sc[...] + tile_sum

    @pl.when(kt == pl.num_programs(1) - 1)
    def _():
        m_ref[...] = (max_sc[...] - sum_sc[...] * inv_sample_k)[:, None, :]


def _run_metric(qf, kf, count, neg, sample_k):
    BH, L_Q, D = qf.shape
    _, L_K, _ = kf.shape
    budget, vmem_limit = _vmem_config()
    G, TK = _plan_metric(BH, L_Q, L_K, D, qf.dtype.itemsize, budget, _min_grid_steps())
    kern = functools.partial(_metric_kernel, inv_sample_k=1.0 / sample_k)
    m = pl.pallas_call(
        kern,
        out_shape=jax.ShapeDtypeStruct((BH, 1, L_Q), jnp.float32),
        grid=(BH // G, L_K // TK),
        in_specs=[pl.BlockSpec((G, L_Q, D), lambda i, k: (i, 0, 0)),
                  pl.BlockSpec((G, TK, D), lambda i, k: (i, k, 0)),
                  pl.BlockSpec((L_Q, TK), lambda i, k: (0, k)),
                  pl.BlockSpec((L_Q, TK), lambda i, k: (0, k))],
        out_specs=pl.BlockSpec((G, 1, L_Q), lambda i, k: (i, 0, 0)),
        scratch_shapes=[pltpu.VMEM((G, L_Q), jnp.float32),
                        pltpu.VMEM((G, L_Q), jnp.float32)],
        compiler_params=pltpu.CompilerParams(
            dimension_semantics=("parallel", "arbitrary"),
            vmem_limit_bytes=vmem_limit),
    )(qf, kf, count, neg)
    return m[:, 0, :]


# ---------------------------------------------------------------------------
# Kernel 2: reduced-query attention + fused initial-context + fused scatter
# ---------------------------------------------------------------------------
def _plan_sparse(bh, l_q, l_k, n_t, d, io_sz, budget, min_steps,
                 use_cumsum, full_attn, red_attn):
    def need(g, external_ctx0):
        b = (2 * _padded_bytes((g, n_t, d), io_sz)            # Q_red
             + 4 * _padded_bytes((g, l_k, d), io_sz)          # K + V
             + 2 * _padded_bytes((g, n_t, 1), 4)              # indices
             + 2 * _padded_bytes((g, l_q, d), 4)              # context output
             + 3 * _padded_bytes((g, n_t, l_k), 4)            # scores / p / attn
             + 2 * _padded_bytes((g, n_t, l_q), 4)            # one-hot scatter matrix
             + 2 * _padded_bytes((g, l_q, d), 4))             # scattered update (+slack)
        if external_ctx0:
            b += 2 * _padded_bytes((g, l_q, d), 4)
        elif use_cumsum:
            b += _padded_bytes((l_q, l_k), io_sz)             # tril-ones for in-kernel cumsum
        if full_attn:
            b += 3 * _padded_bytes((g, l_k, l_k), 4)
        if red_attn:
            b += 2 * _padded_bytes((g, n_t, l_k), 4)
        return b

    for external in ((False, True) if use_cumsum else (False,)):
        for g in _group_candidates(bh, min_steps):
            if need(g, external) <= budget:
                return g, external
    return 1, bool(use_cumsum)


def _make_sparse_attn_kernel(scale, masked, use_cumsum, external_ctx0, full_attn, red_attn):
    def kernel(*refs):
        if external_ctx0:
            q_ref, k_ref, v_ref, idx_ref, ctx0_ref = refs[:5]
            out_refs = refs[5:]
        else:
            q_ref, k_ref, v_ref, idx_ref = refs[:4]
            ctx0_ref = None
            out_refs = refs[4:]
        ctx_ref = out_refs[0]
        g, n_t, _ = q_ref.shape
        _, l_q, _ = ctx_ref.shape
        l_k = k_ref.shape[1]
        f32 = jnp.float32

        q = q_ref[...] * jnp.asarray(scale, dtype=q_ref.dtype)          # fold scale into Q
        scores = jnp.einsum('gtd,gkd->gtk', q, k_ref[...],
                            preferred_element_type=f32)                 # MXU
        idx = idx_ref[...]                                              # (G, nT, 1); pad rows = -1
        if masked:
            col = jax.lax.broadcasted_iota(jnp.int32, scores.shape, 2)
            scores = jnp.where(col > idx, _MASK_NEG, scores)            # ProbMask, finite
        m = jnp.max(scores, axis=-1, keepdims=True)
        p = jnp.exp(scores - m)
        attn = p * pl.reciprocal(jnp.sum(p, axis=-1, keepdims=True), approx=True)
        upd = jnp.einsum('gtk,gkd->gtd', attn.astype(v_ref.dtype), v_ref[...],
                         preferred_element_type=f32)                    # (G, nT, D) MXU

        # Fused _update_context: one-hot MXU scatter of the nT updated rows into the full
        # context; padded rows carry idx = -1 so they never match a position.
        pos_q = jax.lax.broadcasted_iota(jnp.int32, (g, n_t, l_q), 2)
        onehot = (pos_q == idx).astype(f32)                             # (G, nT, L_Q)
        upd_full = jnp.einsum('gtl,gtd->gld', onehot, upd,
                              preferred_element_type=f32)               # (G, L_Q, D)
        sel = jnp.max(onehot, axis=1)[:, :, None]                       # (G, L_Q, 1)

        if external_ctx0:                       # long-L fallback: ctx0 streamed from HBM
            ctx_ref[...] = jnp.where(sel > 0.0, upd_full,
                                     ctx0_ref[...].astype(f32)).astype(ctx_ref.dtype)
        elif use_cumsum:                        # masked & L_Q == L_K: cumsum(V) = tril-ones @ V
            rows = jax.lax.broadcasted_iota(jnp.int32, (l_q, l_k), 0)
            cols = jax.lax.broadcasted_iota(jnp.int32, (l_q, l_k), 1)
            tril = (cols <= rows).astype(v_ref.dtype)
            for i in range(g):                  # static loop: one (L_Q,L_K)x(L_K,D) MXU matmul/head
                ctx0_i = jnp.dot(tril, v_ref[i], preferred_element_type=f32)
                ctx_ref[i] = jnp.where(sel[i] > 0.0, upd_full[i], ctx0_i).astype(ctx_ref.dtype)
        else:                                   # mean(V): sublane reduce, broadcast on write
            vmean = jnp.mean(v_ref[...].astype(f32), axis=1, keepdims=True)
            ctx_ref[...] = jnp.where(sel > 0.0, upd_full, vmean).astype(ctx_ref.dtype)

        if full_attn:                           # fused "ones/L_K + row scatter" attention output
            attn_rows = jnp.einsum('gtl,gtk->glk', onehot, attn,
                                   preferred_element_type=f32)
            out_refs[1][...] = jnp.where(sel > 0.0, attn_rows,
                                         1.0 / l_k).astype(out_refs[1].dtype)
        elif red_attn:
            out_refs[1][...] = attn.astype(out_refs[1].dtype)
    return kernel


def _run_sparse_attn(q_red, kf, vf, idx, l_q, *, scale, masked, use_cumsum,
                     full_attn, red_attn):
    BH, nT, D = q_red.shape
    _, L_K, _ = kf.shape
    budget, vmem_limit = _vmem_config()
    G, external_ctx0 = _plan_sparse(BH, l_q, L_K, nT, D, kf.dtype.itemsize, budget,
                                    _min_grid_steps(), use_cumsum, full_attn, red_attn)
    kern = _make_sparse_attn_kernel(scale, masked, use_cumsum, external_ctx0,
                                    full_attn, red_attn)

    in_specs = [pl.BlockSpec((G, nT, D), lambda i: (i, 0, 0)),
                pl.BlockSpec((G, L_K, D), lambda i: (i, 0, 0)),
                pl.BlockSpec((G, L_K, D), lambda i: (i, 0, 0)),
                pl.BlockSpec((G, nT, 1), lambda i: (i, 0, 0))]
    args = [q_red, kf, vf, idx]
    io_aliases = {}
    if external_ctx0:
        # tril would not fit in VMEM at this L: XLA cumsum, aliased onto the context output
        # so no second (BH, L_Q, D) HBM buffer is allocated.
        ctx0 = jnp.cumsum(vf.astype(jnp.float32), axis=1)
        in_specs.append(pl.BlockSpec((G, l_q, D), lambda i: (i, 0, 0)))
        args.append(ctx0)
        io_aliases = {4: 0}

    ctx_shape = jax.ShapeDtypeStruct((BH, l_q, D), jnp.float32)
    ctx_spec = pl.BlockSpec((G, l_q, D), lambda i: (i, 0, 0))
    if full_attn:
        out_shape = (ctx_shape, jax.ShapeDtypeStruct((BH, L_K, L_K), jnp.float32))
        out_specs = (ctx_spec, pl.BlockSpec((G, L_K, L_K), lambda i: (i, 0, 0)))
    elif red_attn:
        out_shape = (ctx_shape, jax.ShapeDtypeStruct((BH, nT, L_K), jnp.float32))
        out_specs = (ctx_spec, pl.BlockSpec((G, nT, L_K), lambda i: (i, 0, 0)))
    else:
        out_shape = ctx_shape
        out_specs = ctx_spec

    return pl.pallas_call(
        kern,
        out_shape=out_shape,
        grid=(BH // G,),
        in_specs=in_specs,
        out_specs=out_specs,
        input_output_aliases=io_aliases,
        compiler_params=pltpu.CompilerParams(dimension_semantics=("parallel",),
                                             vmem_limit_bytes=vmem_limit),
    )(*args)


# ---------------------------------------------------------------------------
# Kernel 3: dense fallback (L <= factor) — matches PyTorch: no mask, attn returned.
# ---------------------------------------------------------------------------
def _make_dense_attn_kernel(scale):
    def kernel(q_ref, k_ref, v_ref, ctx_ref, attn_ref):
        q = q_ref[...] * jnp.asarray(scale, dtype=q_ref.dtype)
        scores = jnp.einsum('gqd,gkd->gqk', q, k_ref[...],
                            preferred_element_type=jnp.float32)
        m = jnp.max(scores, axis=-1, keepdims=True)
        p = jnp.exp(scores - m)
        attn = p * pl.reciprocal(jnp.sum(p, axis=-1, keepdims=True), approx=True)
        ctx_ref[...] = jnp.einsum('gqk,gkd->gqd', attn.astype(v_ref.dtype), v_ref[...],
                                  preferred_element_type=jnp.float32).astype(ctx_ref.dtype)
        attn_ref[...] = attn.astype(attn_ref.dtype)
    return kernel


def _run_dense_attn(qf, kf, vf, scale):
    BH, L_Q, D = qf.shape
    _, L_K, _ = kf.shape
    budget, vmem_limit = _vmem_config()
    io_sz = qf.dtype.itemsize
    G = 1
    for g in _group_candidates(BH, _min_grid_steps()):
        need = (2 * _padded_bytes((g, L_Q, D), io_sz)
                + 4 * _padded_bytes((g, L_K, D), io_sz)
                + 2 * _padded_bytes((g, L_Q, D), 4)
                + 5 * _padded_bytes((g, L_Q, L_K), 4))
        if need <= budget:
            G = g
            break
    kern = _make_dense_attn_kernel(scale)
    return pl.pallas_call(
        kern,
        out_shape=(jax.ShapeDtypeStruct((BH, L_Q, D), jnp.float32),
                   jax.ShapeDtypeStruct((BH, L_Q, L_K), jnp.float32)),
        grid=(BH // G,),
        in_specs=[pl.BlockSpec((G, L_Q, D), lambda i: (i, 0, 0)),
                  pl.BlockSpec((G, L_K, D), lambda i: (i, 0, 0)),
                  pl.BlockSpec((G, L_K, D), lambda i: (i, 0, 0))],
        out_specs=(pl.BlockSpec((G, L_Q, D), lambda i: (i, 0, 0)),
                   pl.BlockSpec((G, L_Q, L_K), lambda i: (i, 0, 0))),
        compiler_params=pltpu.CompilerParams(dimension_semantics=("parallel",),
                                             vmem_limit_bytes=vmem_limit),
    )(qf, kf, vf)


# ---------------------------------------------------------------------------
# Forward pass mirroring ProbAttention.forward
# ---------------------------------------------------------------------------
def prob_attention_forward(queries, keys, values, attn_mask=None, *,
                           mask_flag=True, factor=5, scale=None,
                           output_attention=False, sample_key=None,
                           use_bf16=False):
    del attn_mask  # PyTorch module rebuilds ProbMask internally; the argument is unused.
    B, L_Q, H, D = queries.shape
    _, L_K, _, _ = keys.shape
    BH = B * H
    io_dtype = jnp.bfloat16 if use_bf16 else jnp.float32
    # Transpose + (optional bf16) cast fused into one XLA pass; kernels then stream io_dtype.
    Qf = jnp.transpose(queries, (0, 2, 1, 3)).reshape(BH, L_Q, D).astype(io_dtype)
    Kf = jnp.transpose(keys, (0, 2, 1, 3)).reshape(BH, L_K, D).astype(io_dtype)
    Vf = jnp.transpose(values, (0, 2, 1, 3)).reshape(BH, L_K, D).astype(io_dtype)
    scale_val = float(scale) if scale is not None else 1.0 / math.sqrt(D)

    # Dense fallback: PyTorch applies NO mask here and always returns attention weights.
    if L_K <= factor or L_Q <= factor:
        ctx, attn = _run_dense_attn(Qf, Kf, Vf, scale_val)
        ctx = ctx.reshape(B, H, L_Q, D).transpose(0, 2, 1, 3)
        return ctx, attn.reshape(B, H, L_Q, L_K)

    U_part = max(1, min(factor * int(math.ceil(math.log(L_K))), L_K))
    u = max(1, min(factor * int(math.ceil(math.log(L_Q))), L_Q))
    sample_k = max(1, min(U_part, L_K))
    n_top = max(1, min(u, L_Q))

    # --- _prob_QK: pick the n_top "active" queries ---
    if sample_k >= L_K:
        # PyTorch takes the first n_top queries in this regime (no metric / no top-k).
        index = jnp.broadcast_to(jnp.arange(n_top, dtype=jnp.int32)[None], (BH, n_top))
        Q_red = Qf[:, :n_top, :]
    else:
        if sample_key is None:
            sample_key = jax.random.PRNGKey(0)
        # TODO(synk): torch.randint RNG cannot be matched bit-for-bit; jax.random is used.
        idx_sample = jax.random.randint(sample_key, (L_Q, sample_k), 0, L_K)
        # Per-(query, key) sample multiplicity + additive 0/-1e30 mask (shared across heads).
        count = jnp.zeros((L_Q, L_K), jnp.float32).at[
            jnp.arange(L_Q)[:, None], idx_sample].add(1.0)
        neg = jnp.where(count > 0.0, 0.0, _MASK_NEG)
        M = _run_metric(Qf, Kf, count.astype(io_dtype), neg.astype(io_dtype), sample_k)
        _, M_top = jax.lax.top_k(M, n_top)
        index = M_top.astype(jnp.int32)
        Q_red = jnp.take_along_axis(Qf, index[..., None], axis=1)        # small gather

    # Pad the selected-query dim to a sublane multiple; padded rows carry index = -1 so
    # the fused one-hot scatter ignores them without any extra validity compare.
    nT_pad = max(8, _round_up(n_top, 8))
    pad = nT_pad - n_top
    if pad:
        Q_red = jnp.pad(Q_red, ((0, 0), (0, pad), (0, 0)))
        index_p = jnp.pad(index, ((0, 0), (0, pad)), constant_values=-1)
    else:
        index_p = index

    use_cumsum = bool(mask_flag) and (L_Q == L_K)          # _get_initial_context branch
    full_attn = bool(output_attention) and (L_Q == L_K)    # fused attns output
    red_attn = bool(output_attention) and not full_attn

    res = _run_sparse_attn(Q_red, Kf, Vf, index_p[..., None].astype(jnp.int32), L_Q,
                           scale=scale_val, masked=bool(mask_flag), use_cumsum=use_cumsum,
                           full_attn=full_attn, red_attn=red_attn)

    if full_attn:
        context, attns = res
        attns = attns.reshape(B, H, L_K, L_K)
    elif red_attn:
        context, attn_red = res
        # TODO(synk): rare L_Q != L_K + output_attention corner keeps the XLA fill/scatter.
        bh = jnp.arange(BH)[:, None]
        attns = jnp.full((BH, L_K, L_K), 1.0 / L_K, dtype=jnp.float32)
        attns = attns.at[bh, index, :].set(attn_red[:, :n_top, :])
        attns = attns.reshape(B, H, L_K, L_K)
    else:
        context = res
        attns = None

    context = context.reshape(B, H, L_Q, D).transpose(0, 2, 1, 3)
    return context, attns


# ---------------------------------------------------------------------------
# Pure-JAX reference (same math, same sampling key) for a sanity check.
# ---------------------------------------------------------------------------
def _reference(queries, keys, values, *, mask_flag=True, factor=5, scale=None,
               sample_key=None):
    B, L_Q, H, D = queries.shape
    _, L_K, _, _ = keys.shape
    Q = jnp.transpose(queries, (0, 2, 1, 3))
    K = jnp.transpose(keys, (0, 2, 1, 3))
    V = jnp.transpose(values, (0, 2, 1, 3))
    scale_val = scale if scale is not None else 1.0 / math.sqrt(D)
    if L_K <= factor or L_Q <= factor:
        s = jnp.einsum('bhqd,bhkd->bhqk', Q, K, precision='highest') * scale_val
        a = jax.nn.softmax(s, axis=-1)
        c = jnp.einsum('bhqk,bhkd->bhqd', a, V, precision='highest')
        return jnp.transpose(c, (0, 2, 1, 3)), a
    U_part = max(1, min(factor * int(math.ceil(math.log(L_K))), L_K))
    u = max(1, min(factor * int(math.ceil(math.log(L_Q))), L_Q))
    sample_k = max(1, min(U_part, L_K))
    n_top = max(1, min(u, L_Q))
    if sample_k >= L_K:
        index = jnp.broadcast_to(jnp.arange(n_top)[None, None], (B, H, n_top))
        Q_red = Q[:, :, :n_top, :]
    else:
        idx_sample = jax.random.randint(sample_key, (L_Q, sample_k), 0, L_K)
        K_sample = K[:, :, idx_sample, :]
        qk = jnp.einsum('bhqd,bhqsd->bhqs', Q, K_sample, precision='highest')
        M = jnp.max(qk, -1) - jnp.sum(qk, -1) / sample_k
        _, index = jax.lax.top_k(M, n_top)
        Q_red = jnp.take_along_axis(Q, index[..., None], axis=2)
    scores = jnp.einsum('bhtd,bhkd->bhtk', Q_red, K, precision='highest') * scale_val
    if mask_flag:
        col = jnp.arange(L_K)[None, None, None, :]
        scores = jnp.where(col > index[..., None], -jnp.inf, scores)
    attn = jax.nn.softmax(scores, axis=-1)
    upd = jnp.einsum('bhtk,bhkd->bhtd', attn, V, precision='highest')
    if (not mask_flag) or (L_Q != L_K):
        ctx0 = jnp.broadcast_to(jnp.mean(V, axis=2, keepdims=True), (B, H, L_Q, D))
    else:
        ctx0 = jnp.cumsum(V, axis=2)
    b_idx = jnp.arange(B)[:, None, None]
    h_idx = jnp.arange(H)[None, :, None]
    ctx = ctx0.at[b_idx, h_idx, index, :].set(upd)
    return jnp.transpose(ctx, (0, 2, 1, 3)), None


if __name__ == "__main__":
    B, H, L, D = 2, 4, 64, 32   # L > factor and sample_k < L_K -> full ProbSparse path
    key = jax.random.PRNGKey(0)
    kq, kk, kv, ks = jax.random.split(key, 4)
    q_in = jax.random.normal(kq, (B, L, H, D), jnp.float32)
    k_in = jax.random.normal(kk, (B, L, H, D), jnp.float32)
    v_in = jax.random.normal(kv, (B, L, H, D), jnp.float32)

    # 1) masked f32 path (cumsum initial context) vs. pure-JAX reference.
    context, attn = prob_attention_forward(
        q_in, k_in, v_in, None,
        mask_flag=True, factor=5, scale=None,
        output_attention=False, sample_key=ks, use_bf16=False)
    context = jax.block_until_ready(context)
    assert context.shape == (B, L, H, D)
    assert attn is None
    ref_context, _ = _reference(q_in, k_in, v_in,
                                mask_flag=True, factor=5, scale=None, sample_key=ks)
    err = float(jnp.max(jnp.abs(context - ref_context)))
    assert err < 1e-2, f"masked path max abs err {err}"

    # 2) unmasked f32 path (mean initial context) vs. reference.
    ctx_nm, attn_nm = prob_attention_forward(
        q_in, k_in, v_in, None,
        mask_flag=False, factor=5, scale=None,
        output_attention=False, sample_key=ks, use_bf16=False)
    ctx_nm = jax.block_until_ready(ctx_nm)
    ref_nm, _ = _reference(q_in, k_in, v_in,
                           mask_flag=False, factor=5, scale=None, sample_key=ks)
    err_nm = float(jnp.max(jnp.abs(ctx_nm - ref_nm)))
    assert err_nm < 1e-2, f"unmasked path max abs err {err_nm}"

    # 3) bf16-MXU path with fused attention output; finite / shape check only.
    ctx_bf16, attns = prob_attention_forward(
        q_in, k_in, v_in, None,
        mask_flag=True, factor=5, scale=None,
        output_attention=True, sample_key=ks, use_bf16=True)
    ctx_bf16 = jax.block_until_ready(ctx_bf16)
    assert ctx_bf16.shape == (B, L, H, D)
    assert attns.shape == (B, H, L, L)
    assert bool(jnp.all(jnp.isfinite(ctx_bf16))) and bool(jnp.all(jnp.isfinite(attns)))

    print("KERNEL_OK")
</pallas_src>

<mosaic_0001>
module attributes {stable_mosaic.version = 11 : i64} {
  func.func @_metric_kernel(%arg0: i32, %arg1: i32, %arg2: memref<4x64x32xf32, #tpu.memory_space<vmem>>, %arg3: memref<4x64x32xf32, #tpu.memory_space<vmem>>, %arg4: memref<64x64xf32, #tpu.memory_space<vmem>>, %arg5: memref<64x64xf32, #tpu.memory_space<vmem>>, %arg6: memref<4x1x64xf32, #tpu.memory_space<vmem>>, %arg7: memref<4x64xf32, #tpu.memory_space<vmem>>, %arg8: memref<4x64xf32, #tpu.memory_space<vmem>>) attributes {dimension_semantics = [#tpu.dimension_semantics<parallel>, #tpu.dimension_semantics<arbitrary>], iteration_bounds = array<i64: 2, 1>, scalar_prefetch = 0 : i64, scratch_operands = 2 : i64, tpu.core_type = #tpu.core_type<tc>, window_params = [{transform_indices = @transform_0, window_bounds = array<i64: 4, 64, 32>}, {transform_indices = @transform_1, window_bounds = array<i64: 4, 64, 32>}, {transform_indices = @transform_2, window_bounds = array<i64: 64, 64>}, {transform_indices = @transform_3, window_bounds = array<i64: 64, 64>}, {transform_indices = @transform_4, window_bounds = array<i64: 4, 1, 64>}]} {
    %c0_i32 = arith.constant 0 : i32
    %0 = arith.cmpi eq, %arg1, %c0_i32 : i32
    %1 = arith.extui %0 : i1 to i32
    %c0_i32_0 = arith.constant 0 : i32
    %2 = arith.cmpi ne, %1, %c0_i32_0 : i32
    scf.if %2 {
      %cst_22 = arith.constant 0xFF800000 : f32
      %25 = vector.broadcast %cst_22 : f32 to vector<4x64xf32>
      %c0_23 = arith.constant 0 : index
      %c0_24 = arith.constant 0 : index
      %26 = vector.load %arg7[%c0_23, %c0_24] : memref<4x64xf32, #tpu.memory_space<vmem>>, vector<4x64xf32>
      tpu.vector_store %arg7[%c0_23, %c0_24], %25 {strides = array<i32>} : memref<4x64xf32, #tpu.memory_space<vmem>>, vector<4x64xf32>,
      %cst_25 = arith.constant 0.000000e+00 : f32
      %27 = vector.broadcast %cst_25 : f32 to vector<4x64xf32>
      %c0_26 = arith.constant 0 : index
      %c0_27 = arith.constant 0 : index
      %28 = vector.load %arg8[%c0_26, %c0_27] : memref<4x64xf32, #tpu.memory_space<vmem>>, vector<4x64xf32>
      tpu.vector_store %arg8[%c0_26, %c0_27], %27 {strides = array<i32>} : memref<4x64xf32, #tpu.memory_space<vmem>>, vector<4x64xf32>,
    } else {
    }
    %c0 = arith.constant 0 : index
    %c0_1 = arith.constant 0 : index
    %c0_2 = arith.constant 0 : index
    %3 = vector.load %arg2[%c0, %c0_1, %c0_2] : memref<4x64x32xf32, #tpu.memory_space<vmem>>, vector<4x64x32xf32>
    %c0_3 = arith.constant 0 : index
    %c0_4 = arith.constant 0 : index
    %c0_5 = arith.constant 0 : index
    %4 = vector.load %arg3[%c0_3, %c0_4, %c0_5] : memref<4x64x32xf32, #tpu.memory_space<vmem>>, vector<4x64x32xf32>
    "tpu.trace_start"() <{level = 10 : i32, message = "gqd,gkd->gqk"}> : () -> ()
    %cst = arith.constant dense<0.000000e+00> : vector<4x64x64xf32>
    %5 = tpu.matmul %3, %4, %cst {dimension_numbers = #tpu.dot_dimension_numbers<[2], [2], [1], [1], [0, 0, 0, 1, 1, 1], [0], [0]>} : vector<4x64x32xf32>, vector<4x64x32xf32>, vector<4x64x64xf32> -> vector<4x64x64xf32>
    "tpu.trace_stop"() : () -> ()
    %c0_6 = arith.constant 0 : index
    %c0_7 = arith.constant 0 : index
    %6 = vector.load %arg5[%c0_6, %c0_7] : memref<64x64xf32, #tpu.memory_space<vmem>>, vector<64x64xf32>
    %7 = vector.shape_cast %6 : vector<64x64xf32> to vector<1x64x64xf32>
    %8 = vector.broadcast %7 : vector<1x64x64xf32> to vector<4x64x64xf32>
    %9 = arith.addf %5, %8 : vector<4x64x64xf32>
    %cst_8 = arith.constant dense<0xFF800000> : vector<4x64xf32>
    %10 = vector.multi_reduction <maximumf>, %9, %cst_8 [2] : vector<4x64x64xf32> to vector<4x64xf32>
    %c0_9 = arith.constant 0 : index
    %c0_10 = arith.constant 0 : index
    %11 = vector.load %arg4[%c0_9, %c0_10] : memref<64x64xf32, #tpu.memory_space<vmem>>, vector<64x64xf32>
    %12 = vector.shape_cast %11 : vector<64x64xf32> to vector<1x64x64xf32>
    %13 = vector.broadcast %12 : vector<1x64x64xf32> to vector<4x64x64xf32>
    %14 = arith.mulf %5, %13 : vector<4x64x64xf32>
    %cst_11 = arith.constant dense<0.000000e+00> : vector<4x64xf32>
    %15 = vector.multi_reduction <add>, %14, %cst_11 [2] : vector<4x64x64xf32> to vector<4x64xf32>
    %c0_12 = arith.constant 0 : index
    %c0_13 = arith.constant 0 : index
    %16 = vector.load %arg7[%c0_12, %c0_13] : memref<4x64xf32, #tpu.memory_space<vmem>>, vector<4x64xf32>
    %17 = arith.maximumf %16, %10 : vector<4x64xf32>
    %c0_14 = arith.constant 0 : index
    %c0_15 = arith.constant 0 : index
    %18 = vector.load %arg7[%c0_14, %c0_15] : memref<4x64xf32, #tpu.memory_space<vmem>>, vector<4x64xf32>
    tpu.vector_store %arg7[%c0_14, %c0_15], %17 {strides = array<i32>} : memref<4x64xf32, #tpu.memory_space<vmem>>, vector<4x64xf32>,
    %c0_16 = arith.constant 0 : index
    %c0_17 = arith.constant 0 : index
    %19 = vector.load %arg8[%c0_16, %c0_17] : memref<4x64xf32, #tpu.memory_space<vmem>>, vector<4x64xf32>
    %20 = arith.addf %19, %15 : vector<4x64xf32>
    %c0_18 = arith.constant 0 : index
    %c0_19 = arith.constant 0 : index
    %21 = vector.load %arg8[%c0_18, %c0_19] : memref<4x64xf32, #tpu.memory_space<vmem>>, vector<4x64xf32>
    tpu.vector_store %arg8[%c0_18, %c0_19], %20 {strides = array<i32>} : memref<4x64xf32, #tpu.memory_space<vmem>>, vector<4x64xf32>,
    %c0_i32_20 = arith.constant 0 : i32
    %22 = arith.cmpi eq, %arg1, %c0_i32_20 : i32
    %23 = arith.extui %22 : i1 to i32
    %c0_i32_21 = arith.constant 0 : i32
    %24 = arith.cmpi ne, %23, %c0_i32_21 : i32
    scf.if %24 {
      %c0_22 = arith.constant 0 : index
      %c0_23 = arith.constant 0 : index
      %25 = vector.load %arg7[%c0_22, %c0_23] : memref<4x64xf32, #tpu.memory_space<vmem>>, vector<4x64xf32>
      %c0_24 = arith.constant 0 : index
      %c0_25 = arith.constant 0 : index
      %26 = vector.load %arg8[%c0_24, %c0_25] : memref<4x64xf32, #tpu.memory_space<vmem>>, vector<4x64xf32>
      %cst_26 = arith.constant 4.000000e-02 : f32
      %27 = vector.broadcast %cst_26 : f32 to vector<4x64xf32>
      %28 = arith.mulf %26, %27 : vector<4x64xf32>
      %29 = arith.subf %25, %28 : vector<4x64xf32>
      %30 = vector.shape_cast %29 : vector<4x64xf32> to vector<4x1x64xf32>
      %c0_27 = arith.constant 0 : index
      %c0_28 = arith.constant 0 : index
      %c0_29 = arith.constant 0 : index
      %31 = vector.load %arg6[%c0_27, %c0_28, %c0_29] : memref<4x1x64xf32, #tpu.memory_space<vmem>>, vector<4x1x64xf32>
      tpu.vector_store %arg6[%c0_27, %c0_28, %c0_29], %30 {strides = array<i32>} : memref<4x1x64xf32, #tpu.memory_space<vmem>>, vector<4x1x64xf32>,
    } else {
    }
    return
  }
  func.func @transform_0(%arg0: i32, %arg1: i32) -> (i32, i32, i32) {
    %c0_i32 = arith.constant 0 : i32
    %c0_i32_0 = arith.constant 0 : i32
    %c0_i32_1 = arith.constant 0 : i32
    return %arg0, %c0_i32, %c0_i32_0 : i32, i32, i32
  }
  func.func @transform_1(%arg0: i32, %arg1: i32) -> (i32, i32, i32) {
    %c0_i32 = arith.constant 0 : i32
    %c0_i32_0 = arith.constant 0 : i32
    return %arg0, %arg1, %c0_i32 : i32, i32, i32
  }
  func.func @transform_2(%arg0: i32, %arg1: i32) -> (i32, i32) {
    %c0_i32 = arith.constant 0 : i32
    %c0_i32_0 = arith.constant 0 : i32
    return %c0_i32, %arg1 : i32, i32
  }
  func.func @transform_3(%arg0: i32, %arg1: i32) -> (i32, i32) {
    %c0_i32 = arith.constant 0 : i32
    %c0_i32_0 = arith.constant 0 : i32
    return %c0_i32, %arg1 : i32, i32
  }
  func.func @transform_4(%arg0: i32, %arg1: i32) -> (i32, i32, i32) {
    %c0_i32 = arith.constant 0 : i32
    %c0_i32_0 = arith.constant 0 : i32
    %c0_i32_1 = arith.constant 0 : i32
    return %arg0, %c0_i32, %c0_i32_0 : i32, i32, i32
  }
}

</mosaic_0001>

<llo_original>
// kernel: tpu_custom_call.1
$region0: #{tpu_custom_call.1}
  #allocation0 [shape = 'u32[]', space=smem, size = 0x4, offset = 0x4, fixed_abs, tag = 'smem constant byte address 0x4 - core index']
  #allocation1 [shape = 'u32[144,128]{1,0:T(1,128)}', space=vmem, size = 0x12000, scoped, tag = 'internal scratch']
  #allocation2 [shape = 'f32[4,64]{1,0:T(4,128)}', space=vmem, size = 0x800, scoped, tag = 'scratch operand']
  #allocation3 [shape = 'f32[4,64]{1,0:T(4,128)}', space=vmem, size = 0x800, scoped, tag = 'scratch operand']
  %s0 = inlined_call_operand.vmem [shape: f32[8,64,32], index: 0, kind: input, shape index: {}]
  %s1 = inlined_call_operand.vmem [shape: f32[8,64,32], index: 1, kind: input, shape index: {}]
  %s2 = inlined_call_operand.vmem [shape: f32[64,64], index: 2, kind: input, shape index: {}]
  %s3 = inlined_call_operand.vmem [shape: f32[64,64], index: 3, kind: input, shape index: {}]
  %s4 = inlined_call_operand.hbm [shape: f32[8,1,64], index: 4, kind: output, shape index: {}]
  %s5 = sld [smem:[#allocation0]]
  $region57: #{tpu_custom_call.1} parent=0
    _
  %s7 = ssub.s32 1, %s5
  %s8 = scalar_select 0, %s7, %s5
  $region1: #{tpu_custom_call.1} parent=0
    #allocation4 [shape = 'u8[4096]{0}', space=vmem, size = 0x1000, scoped, tag = 'output window, operand 0']
    #allocation5 [shape = 's32[2]{0}', space=sflag, size = 0x8, scoped, tag = 'scoped memory for tpu_custom_call.1']
    %9 = vsyncpa [#allocation5], 0
    %s10 = scalar_lea.sflag [#allocation5], 1
    %11 = vsyncpa %s10, 0
    loop: start=0, step=1, limit=4
    $region2: #{tpu_custom_call.1} parent=1 // loop_pre_header
      _
    $region3: #{tpu_custom_call.1} parent=1 // loop_header
      %s13 = sphi 0, %s17
      %p14 = scmp.ge.s32.totalorder %s13, 4
      %s20 = sphi 0, %s32
      %s21 = sphi 0, %s28
      %s22 = sphi 0, %s20
      %s23 = sphi 0, %s21
      %s24 = sphi 0, %s22
      %s25 = sphi 0, %s23
      %s35 = sphi 0, %s37
      %s38 = sphi 0, %s35
      %s39 = sphi 0, %s38
      %s55 = sphi 0, %s39
      %s63 = sphi 0, %s65
      %s66 = sphi 0, %s63
      %s67 = sphi 0, %s66
      %s83 = sphi 0, %s67
      %s89 = sphi 0, %s91
      %s92 = sphi 0, %s89
      %s93 = sphi 0, %s92
      %s109 = sphi 0, %s93
      %s115 = sphi 0, %s117
      %s118 = sphi 0, %s115
      %s119 = sphi 0, %s118
      %s135 = sphi 0, %s119
      %s141 = sphi 0, %s143
      %s144 = sphi 0, %s141
      %s145 = sphi 0, %s144
      %s161 = sphi 0, %s145
    $region4: #{tpu_custom_call.1} parent=1 // loop_header_branch
      %16 = sbr.rel (%p14) target = $region8
    $region5: #{tpu_custom_call.1} parent=1 // loop_body
      %s18 = ssub.s32 %s13, 1
      %s19 = ssub.s32 %s13, 2
      %s26 = sadd.s32 1, %s21
      %p27 = scmp.ge.s32.totalorder %s26, 1
      %s28 = scalar_select %p27, 0, %s26
      %s29 = sadd.s32 1, %s20
      %s30 = scalar_select %p27, %s29, %s20
      %p31 = scmp.ge.s32.totalorder %s30, 2
      %s32 = scalar_select %p31, 0, %s30
      %s33 = ssub.s32 %s20, %s32
      %p34 = scmp.eq.s32.totalorder %s33, 0
      %s36 = sadd.s32 %s35, 1
      %s37 = scalar_select %p34, %s35, %s36
      %p40 = pneg %p34
      %p41 = scmp.eq.s32.totalorder %s13, 1
      %p42 = por %p40, %p41
      %p43 = scmp.ne.s32.totalorder %s35, %s38
      %p44 = scmp.eq.s32.totalorder %s13, 0
      %p45 = por %p43, %p44
      %p46 = scmp.ne.s32.totalorder %s35, %s38
      %p47 = scmp.eq.s32.totalorder %s18, 1
      %p48 = por %p46, %p47
      %p49 = scmp.ne.s32.totalorder %s38, %s39
      %p50 = scmp.eq.s32.totalorder %s18, 0
      %p51 = por %p49, %p50
      %p52 = scmp.ne.s32.totalorder %s38, %s39
      %p53 = scmp.eq.s32.totalorder %s19, 1
      %p54 = por %p52, %p53
      %p56 = scmp.ne.s32.totalorder %s39, %s55
      %p57 = scmp.eq.s32.totalorder %s19, 0
      %p58 = por %p56, %p57
      %s59 = ssub.s32 %s20, %s32
      %s60 = ssub.s32 %s21, %s28
      %s61 = sor.u32 %s59, %s60
      %p62 = scmp.eq.s32.totalorder %s61, 0
      %s64 = sadd.s32 %s63, 1
      %s65 = scalar_select %p62, %s63, %s64
      %p68 = pneg %p62
      %p69 = scmp.eq.s32.totalorder %s13, 1
      %p70 = por %p68, %p69
      %p71 = scmp.ne.s32.totalorder %s63, %s66
      %p72 = scmp.eq.s32.totalorder %s13, 0
      %p73 = por %p71, %p72
      %p74 = scmp.ne.s32.totalorder %s63, %s66
      %p75 = scmp.eq.s32.totalorder %s18, 1
      %p76 = por %p74, %p75
      %p77 = scmp.ne.s32.totalorder %s66, %s67
      %p78 = scmp.eq.s32.totalorder %s18, 0
      %p79 = por %p77, %p78
      %p80 = scmp.ne.s32.totalorder %s66, %s67
      %p81 = scmp.eq.s32.totalorder %s19, 1
      %p82 = por %p80, %p81
      %p84 = scmp.ne.s32.totalorder %s67, %s83
      %p85 = scmp.eq.s32.totalorder %s19, 0
      %p86 = por %p84, %p85
      %s87 = ssub.s32 %s21, %s28
      %p88 = scmp.eq.s32.totalorder %s87, 0
      %s90 = sadd.s32 %s89, 1
      %s91 = scalar_select %p88, %s89, %s90
      %p94 = pneg %p88
      %p95 = scmp.eq.s32.totalorder %s13, 1
      %p96 = por %p94, %p95
      %p97 = scmp.ne.s32.totalorder %s89, %s92
      %p98 = scmp.eq.s32.totalorder %s13, 0
      %p99 = por %p97, %p98
      %p100 = scmp.ne.s32.totalorder %s89, %s92
      %p101 = scmp.eq.s32.totalorder %s18, 1
      %p102 = por %p100, %p101
      %p103 = scmp.ne.s32.totalorder %s92, %s93
      %p104 = scmp.eq.s32.totalorder %s18, 0
      %p105 = por %p103, %p104
      %p106 = scmp.ne.s32.totalorder %s92, %s93
      %p107 = scmp.eq.s32.totalorder %s19, 1
      %p108 = por %p106, %p107
      %p110 = scmp.ne.s32.totalorder %s93, %s109
      %p111 = scmp.eq.s32.totalorder %s19, 0
      %p112 = por %p110, %p111
      %s113 = ssub.s32 %s21, %s28
      %p114 = scmp.eq.s32.totalorder %s113, 0
      %s116 = sadd.s32 %s115, 1
      %s117 = scalar_select %p114, %s115, %s116
      %p120 = pneg %p114
      %p121 = scmp.eq.s32.totalorder %s13, 1
      %p122 = por %p120, %p121
      %p123 = scmp.ne.s32.totalorder %s115, %s118
      %p124 = scmp.eq.s32.totalorder %s13, 0
      %p125 = por %p123, %p124
      %p126 = scmp.ne.s32.totalorder %s115, %s118
      %p127 = scmp.eq.s32.totalorder %s18, 1
      %p128 = por %p126, %p127
      %p129 = scmp.ne.s32.totalorder %s118, %s119
      %p130 = scmp.eq.s32.totalorder %s18, 0
      %p131 = por %p129, %p130
      %p132 = scmp.ne.s32.totalorder %s118, %s119
      %p133 = scmp.eq.s32.totalorder %s19, 1
      %p134 = por %p132, %p133
      %p136 = scmp.ne.s32.totalorder %s119, %s135
      %p137 = scmp.eq.s32.totalorder %s19, 0
      %p138 = por %p136, %p137
      %s139 = ssub.s32 %s20, %s32
      %p140 = scmp.eq.s32.totalorder %s139, 0
      %s142 = sadd.s32 %s141, 1
      %s143 = scalar_select %p140, %s141, %s142
      %p146 = pneg %p140
      %p147 = scmp.eq.s32.totalorder %s13, 1
      %p148 = por %p146, %p147
      %p149 = scmp.ne.s32.totalorder %s141, %s144
      %p150 = scmp.eq.s32.totalorder %s13, 0
      %p151 = por %p149, %p150
      %p152 = scmp.ne.s32.totalorder %s141, %s144
      %p153 = scmp.eq.s32.totalorder %s18, 1
      %p154 = por %p152, %p153
      %p155 = scmp.ne.s32.totalorder %s144, %s145
      %p156 = scmp.eq.s32.totalorder %s18, 0
      %p157 = por %p155, %p156
      %p158 = scmp.ne.s32.totalorder %s144, %s145
      %p159 = scmp.eq.s32.totalorder %s19, 1
      %p160 = por %p158, %p159
      %p162 = scmp.ne.s32.totalorder %s145, %s161
      %p163 = scmp.eq.s32.totalorder %s19, 0
      %p164 = por %p162, %p163
      %p165 = scmp.le.s32.totalorder 1, %s13
      %p166 = scmp.lt.s32.totalorder %s13, 3
      %p167 = pnand %p165, %p166
      %p168 = pneg %p167
      // Predicated region
      $region9: #{tpu_custom_call.1} parent=5 // pred_check
        _
      $region10: #{tpu_custom_call.1} parent=5 // pred_check_branch
        %170 = sbr.rel (%p167) target = $region12
      $region11: #{tpu_custom_call.1} parent=5 // pred_region
        %s171 = ssub.s32 %s13, 1
        // Predicated region
        $region13: #{tpu_custom_call.1} parent=11 // pred_check
          %p172 = pneg %p105
        $region14: #{tpu_custom_call.1} parent=11 // pred_check_branch
          %174 = sbr.rel (%p172) target = $region16
        $region15: #{tpu_custom_call.1} parent=11 // pred_region
          %p175 = scmp.lt.s32.totalorder %s23, 0
          %s176 = scalar_select %p175, %s23, 0
          %s177 = smul.addr %s176, 8
          %s178 = scalar_lea.vmem %s2, %s177
        $region16: #{tpu_custom_call.1} parent=11 // pred_fallthru
          _
        // Predicated region
        $region17: #{tpu_custom_call.1} parent=11 // pred_check
          %p179 = pneg %p131
        $region18: #{tpu_custom_call.1} parent=11 // pred_check_branch
          %181 = sbr.rel (%p179) target = $region20
        $region19: #{tpu_custom_call.1} parent=11 // pred_region
          %p182 = scmp.lt.s32.totalorder %s23, 0
          %s183 = scalar_select %p182, %s23, 0
          %s184 = smul.addr %s183, 8
          %s185 = scalar_lea.vmem %s3, %s184
        $region20: #{tpu_custom_call.1} parent=11 // pred_fallthru
          _
      $region12: #{tpu_custom_call.1} parent=5 // pred_fallthru
        _
      %p186 = scmp.lt.s32.totalorder %s13, 2
      // Predicated region
      $region21: #{tpu_custom_call.1} parent=5 // pred_check
        %p187 = pneg %p186
      $region22: #{tpu_custom_call.1} parent=5 // pred_check_branch
        %189 = sbr.rel (%p187) target = $region24
      $region23: #{tpu_custom_call.1} parent=5 // pred_region
        // Predicated region
        $region25: #{tpu_custom_call.1} parent=23 // pred_check
          %p190 = pneg %p45
        $region26: #{tpu_custom_call.1} parent=23 // pred_check_branch
          %192 = sbr.rel (%p190) target = $region28
        $region27: #{tpu_custom_call.1} parent=23 // pred_region
          %s193 = smul.u32 4, %s20
          %p194 = scmp.lt.s32.totalorder %s193, 7
          %s195 = scalar_select %p194, %s193, 7
          %s196 = smul.addr %s195, 8
          %s197 = smul.addr %s196, 8
          %s198 = scalar_lea.vmem %s0, %s197
          %s199 = smul.u32 4, %s20
        $region28: #{tpu_custom_call.1} parent=23 // pred_fallthru
          _
        // Predicated region
        $region29: #{tpu_custom_call.1} parent=23 // pred_check
          %p200 = pneg %p73
        $region30: #{tpu_custom_call.1} parent=23 // pred_check_branch
          %202 = sbr.rel (%p200) target = $region32
        $region31: #{tpu_custom_call.1} parent=23 // pred_region
          %s203 = smul.u32 4, %s20
          %s204 = smul.u32 8, %s21
          %p205 = scmp.lt.s32.totalorder %s203, 7
          %s206 = scalar_select %p205, %s203, 7
          %p207 = scmp.lt.s32.totalorder %s204, 7
          %s208 = scalar_select %p207, %s204, 7
          %s209 = smul.addr %s206, 8
          %s210 = sadd.s32 %s208, %s209
          %s211 = smul.addr %s210, 8
          %s212 = scalar_lea.vmem %s1, %s211
          %s213 = smul.u32 4, %s20
          %s214 = smul.u32 8, %s21
        $region32: #{tpu_custom_call.1} parent=23 // pred_fallthru
          _
      $region24: #{tpu_custom_call.1} parent=5 // pred_fallthru
        _
      %p215 = scmp.le.s32.totalorder 1, %s13
      %p216 = scmp.lt.s32.totalorder %s13, 3
      %p217 = pnand %p215, %p216
      %p218 = pneg %p217
      // Predicated region
      $region33: #{tpu_custom_call.1} parent=5 // pred_check
        _
      $region34: #{tpu_custom_call.1} parent=5 // pred_check_branch
        %220 = sbr.rel (%p217) target = $region36
      $region35: #{tpu_custom_call.1} parent=5 // pred_region
        %s221 = ssub.s32 %s13, 1
        %s222 = smul.u32 4, %s22
        %p223 = scmp.lt.s32.totalorder %s222, 7
        %s224 = scalar_select %p223, %s222, 7
        %s225 = smul.addr %s224, 8
        %s226 = smul.addr %s225, 8
        %s227 = scalar_lea.vmem %s0, %s226
        %p228 = pneg %p51
        %p229 = pneg %p48
        %s230 = smul.u32 4, %s22
        %s231 = smul.u32 8, %s23
        %p232 = scmp.lt.s32.totalorder %s230, 7
        %s233 = scalar_select %p232, %s230, 7
        %p234 = scmp.lt.s32.totalorder %s231, 7
        %s235 = scalar_select %p234, %s231, 7
        %s236 = smul.addr %s233, 8
        %s237 = sadd.s32 %s235, %s236
        %s238 = smul.addr %s237, 8
        %s239 = scalar_lea.vmem %s1, %s238
        %p240 = pneg %p79
        %p241 = pneg %p76
        %p242 = scmp.lt.s32.totalorder %s23, 0
        %s243 = scalar_select %p242, %s23, 0
        %s244 = smul.addr %s243, 8
        %s245 = scalar_lea.vmem %s2, %s244
        %p246 = pneg %p105
        %p247 = pneg %p102
        %p248 = scmp.lt.s32.totalorder %s23, 0
        %s249 = scalar_select %p248, %s23, 0
        %s250 = smul.addr %s249, 8
        %s251 = scalar_lea.vmem %s3, %s250
        %p252 = pneg %p131
        %p253 = pneg %p128
        %p254 = pneg %p157
        %p255 = pneg %p154
        %s256 = sand.u32 %s144, 1
        %s257 = scalar_lea.sflag [#allocation5], %s256
        %s258 = sand.u32 %s144, 1
        %s259 = smul.addr %s258, 4
        %s260 = scalar_lea.vmem [#allocation4], %s259
        %s261 = smul.u32 4, %s22
        %p262 = scmp.lt.s32.totalorder %s261, 7
        %s263 = scalar_select %p262, %s261, 7
        %s264 = smul.addr %s263, 8
        %s265 = smul.addr %s264, 8
        %s266 = scalar_lea.vmem %s0, %s265
        %s267 = smul.u32 4, %s22
        %s268 = smul.u32 4, %s22
        %s269 = smul.u32 8, %s23
        %p270 = scmp.lt.s32.totalorder %s268, 7
        %s271 = scalar_select %p270, %s268, 7
        %p272 = scmp.lt.s32.totalorder %s269, 7
        %s273 = scalar_select %p272, %s269, 7
        %s274 = smul.addr %s271, 8
        %s275 = sadd.s32 %s273, %s274
        %s276 = smul.addr %s275, 8
        %s277 = scalar_lea.vmem %s1, %s276
        %s278 = smul.u32 4, %s22
        %s279 = smul.u32 8, %s23
        %p280 = scmp.lt.s32.totalorder %s23, 0
        %s281 = scalar_select %p280, %s23, 0
        %s282 = smul.addr %s281, 8
        %s283 = scalar_lea.vmem %s2, %s282
        %p284 = scmp.lt.s32.totalorder %s23, 0
        %s285 = scalar_select %p284, %s23, 0
        %s286 = smul.addr %s285, 8
        %s287 = scalar_lea.vmem %s3, %s286
        %s288 = smul.u32 4, %s22
        %p289 = scmp.eq.s32.totalorder %s23, 0
        // Predicated region
        $region37: #{tpu_custom_call.1} parent=35 // pred_check
          %p290 = pneg %p289
        $region38: #{tpu_custom_call.1} parent=35 // pred_check_branch
          %292 = sbr.rel (%p290) target = $region40
        $region39: #{tpu_custom_call.1} parent=35 // pred_region
          %vm293 = vcmask 519168
          %294 = vst.msk [vmem:[#allocation2] sm:$0xf] %vm293, -inf
          %295 = vst.msk [vmem:[#allocation3] sm:$0xf] %vm293, 0.0
        $region40: #{tpu_custom_call.1} parent=35 // pred_fallthru
          _
        %v296 = vld [vmem:[%s266] sm:$0xff]
        %v297 = vld [vmem:[%s266 + $0x8] sm:$0xff]
        %v298 = vld [vmem:[%s266 + $0x10] sm:$0xff]
        %v299 = vld [vmem:[%s266 + $0x18] sm:$0xff]
        %v300 = vld [vmem:[%s266 + $0x20] sm:$0xff]
        %v301 = vld [vmem:[%s266 + $0x28] sm:$0xff]
        %v302 = vld [vmem:[%s266 + $0x30] sm:$0xff]
        %v303 = vld [vmem:[%s266 + $0x38] sm:$0xff]
        %v304 = vld [vmem:[%s266 + $0x40] sm:$0xff]
        %v305 = vld [vmem:[%s266 + $0x48] sm:$0xff]
        %v306 = vld [vmem:[%s266 + $0x50] sm:$0xff]
        %v307 = vld [vmem:[%s266 + $0x58] sm:$0xff]
        %v308 = vld [vmem:[%s266 + $0x60] sm:$0xff]
        %v309 = vld [vmem:[%s266 + $0x68] sm:$0xff]
        %v310 = vld [vmem:[%s266 + $0x70] sm:$0xff]
        %v311 = vld [vmem:[%s266 + $0x78] sm:$0xff]
        %v312 = vld [vmem:[%s266 + $0x80] sm:$0xff]
        %v313 = vld [vmem:[%s266 + $0x88] sm:$0xff]
        %v314 = vld [vmem:[%s266 + $0x90] sm:$0xff]
        %v315 = vld [vmem:[%s266 + $0x98] sm:$0xff]
        %v316 = vld [vmem:[%s266 + $0xa0] sm:$0xff]
        %v317 = vld [vmem:[%s266 + $0xa8] sm:$0xff]
        %v318 = vld [vmem:[%s266 + $0xb0] sm:$0xff]
        %v319 = vld [vmem:[%s266 + $0xb8] sm:$0xff]
        %v320 = vld [vmem:[%s266 + $0xc0] sm:$0xff]
        %v321 = vld [vmem:[%s266 + $0xc8] sm:$0xff]
        %v322 = vld [vmem:[%s266 + $0xd0] sm:$0xff]
        %v323 = vld [vmem:[%s266 + $0xd8] sm:$0xff]
        %v324 = vld [vmem:[%s266 + $0xe0] sm:$0xff]
        %v325 = vld [vmem:[%s266 + $0xe8] sm:$0xff]
        %v326 = vld [vmem:[%s266 + $0xf0] sm:$0xff]
        %v327 = vld [vmem:[%s266 + $0xf8] sm:$0xff]
        %v328 = vld [vmem:[%s277] sm:$0xff]
        %v329 = vld [vmem:[%s277 + $0x8] sm:$0xff]
        %v330 = vld [vmem:[%s277 + $0x10] sm:$0xff]
        %v331 = vld [vmem:[%s277 + $0x18] sm:$0xff]
        %v332 = vld [vmem:[%s277 + $0x20] sm:$0xff]
        %v333 = vld [vmem:[%s277 + $0x28] sm:$0xff]
        %v334 = vld [vmem:[%s277 + $0x30] sm:$0xff]
        %v335 = vld [vmem:[%s277 + $0x38] sm:$0xff]
        %v336 = vld [vmem:[%s277 + $0x40] sm:$0xff]
        %v337 = vld [vmem:[%s277 + $0x48] sm:$0xff]
        %v338 = vld [vmem:[%s277 + $0x50] sm:$0xff]
        %v339 = vld [vmem:[%s277 + $0x58] sm:$0xff]
        %v340 = vld [vmem:[%s277 + $0x60] sm:$0xff]
        %v341 = vld [vmem:[%s277 + $0x68] sm:$0xff]
        %v342 = vld [vmem:[%s277 + $0x70] sm:$0xff]
        %v343 = vld [vmem:[%s277 + $0x78] sm:$0xff]
        %v344 = vld [vmem:[%s277 + $0x80] sm:$0xff]
        %v345 = vld [vmem:[%s277 + $0x88] sm:$0xff]
        %v346 = vld [vmem:[%s277 + $0x90] sm:$0xff]
        %v347 = vld [vmem:[%s277 + $0x98] sm:$0xff]
        %v348 = vld [vmem:[%s277 + $0xa0] sm:$0xff]
        %v349 = vld [vmem:[%s277 + $0xa8] sm:$0xff]
        %v350 = vld [vmem:[%s277 + $0xb0] sm:$0xff]
        %v351 = vld [vmem:[%s277 + $0xb8] sm:$0xff]
        %v352 = vld [vmem:[%s277 + $0xc0] sm:$0xff]
        %v353 = vld [vmem:[%s277 + $0xc8] sm:$0xff]
        %v354 = vld [vmem:[%s277 + $0xd0] sm:$0xff]
        %v355 = vld [vmem:[%s277 + $0xd8] sm:$0xff]
        %v356 = vld [vmem:[%s277 + $0xe0] sm:$0xff]
        %v357 = vld [vmem:[%s277 + $0xe8] sm:$0xff]
        %v358 = vld [vmem:[%s277 + $0xf0] sm:$0xff]
        %v359 = vld [vmem:[%s277 + $0xf8] sm:$0xff]
        %vm360 = vcmask 261120
        %v362 = vsel %vm360, %v296, 0
        %v365 = vsel %vm360, %v297, 0
        %v368 = vsel %vm360, %v298, 0
        %v371 = vsel %vm360, %v299, 0
        %v374 = vsel %vm360, %v300, 0
        %v377 = vsel %vm360, %v301, 0
        %v380 = vsel %vm360, %v302, 0
        %v383 = vsel %vm360, %v303, 0
        %v386 = vsel %vm360, %v328, 0
        %v389 = vsel %vm360, %v329, 0
        %v392 = vsel %vm360, %v330, 0
        %v395 = vsel %vm360, %v331, 0
        %v398 = vsel %vm360, %v332, 0
        %v401 = vsel %vm360, %v333, 0
        %v404 = vsel %vm360, %v334, 0
        %v407 = vsel %vm360, %v335, 0
        %409 = vmatprep.subr.mxu0 0.0
        %410 = vmatpush1.xpose.msra.mxu0 0.0
        %411 = vmatprep.subr.mxu0 0.0
        %412 = vmatpush1.xpose.msra.mxu0 0.0
        %413 = vmatprep.subr.mxu0 0.0
        %414 = vmatpush1.xpose.msra.mxu0 0.0
        %415 = vmatprep.subr.mxu0 0.0
        %416 = vmatpush1.xpose.msra.mxu0 0.0
        %417 = vmatprep.subr.mxu0 0.0
        %418 = vmatpush1.xpose.msra.mxu0 0.0
        %419 = vmatprep.subr.mxu0 0.0
        %420 = vmatpush1.xpose.msra.mxu0 0.0
        %421 = vmatprep.subr.mxu0 0.0
        %422 = vmatpush1.xpose.msra.mxu0 0.0
        %423 = vmatprep.subr.mxu0 0.0
        %424 = vmatpush1.xpose.msra.mxu0 0.0
        %425 = vmatprep.subr.mxu0 0.0
        %426 = vmatpush1.xpose.msra.mxu0 %v407
        %427 = vmatprep.subr.mxu0 0.0
        %428 = vmatpush1.xpose.msra.mxu0 %v404
        %429 = vmatprep.subr.mxu0 0.0
        %430 = vmatpush1.xpose.msra.mxu0 %v401
        %431 = vmatprep.subr.mxu0 0.0
        %432 = vmatpush1.xpose.msra.mxu0 %v398
        %433 = vmatprep.subr.mxu0 0.0
        %434 = vmatpush1.xpose.msra.mxu0 %v395
        %435 = vmatprep.subr.mxu0 0.0
        %436 = vmatpush1.xpose.msra.mxu0 %v392
        %437 = vmatprep.subr.mxu0 0.0
        %438 = vmatpush1.xpose.msra.mxu0 %v389
        %439 = vmatprep.subr.mxu0 0.0
        %440 = vmatpush1.xpose.msra.mxu0 %v386
        %441 = vmatprep.subr.mxu0 0.0
        %442 = vmatpush2.xpose.msra.mxu0 0.0
        %443 = vmatprep.subr.mxu0 0.0
        %444 = vmatpush2.xpose.msra.mxu0 0.0
        %445 = vmatprep.subr.mxu0 0.0
        %446 = vmatpush2.xpose.msra.mxu0 0.0
        %447 = vmatprep.subr.mxu0 0.0
        %448 = vmatpush2.xpose.msra.mxu0 0.0
        %449 = vmatprep.subr.mxu0 0.0
        %450 = vmatpush2.xpose.msra.mxu0 0.0
        %451 = vmatprep.subr.mxu0 0.0
        %452 = vmatpush2.xpose.msra.mxu0 0.0
        %453 = vmatprep.subr.mxu0 0.0
        %454 = vmatpush2.xpose.msra.mxu0 0.0
        %455 = vmatprep.subr.mxu0 0.0
        %456 = vmatpush2.xpose.msra.mxu0 0.0
        %457 = vmatprep.subr.mxu0 0.0
        %458 = vmatpush2.xpose.msra.mxu0 0.0
        %459 = vmatprep.subr.mxu0 0.0
        %460 = vmatpush2.xpose.msra.mxu0 0.0
        %461 = vmatprep.subr.mxu0 0.0
        %462 = vmatpush2.xpose.msra.mxu0 0.0
        %463 = vmatprep.subr.mxu0 0.0
        %464 = vmatpush2.xpose.msra.mxu0 0.0
        %465 = vmatprep.subr.mxu0 0.0
        %466 = vmatpush2.xpose.msra.mxu0 0.0
        %467 = vmatprep.subr.mxu0 0.0
        %468 = vmatpush2.xpose.msra.mxu0 0.0
        %469 = vmatprep.subr.mxu0 0.0
        %470 = vmatpush2.xpose.msra.mxu0 0.0
        %471 = vmatprep.subr.mxu0 0.0
        %472 = vmatpush2.xpose.msra.mxu0 0.0
        %473 = vmatprep.mubr.f32.mxu0 0.0
        %474 = vmatmul.mubr.f32.gmra.mxu0 %v362
        %v475 = vpop.f32.mrf.mxu0
        %v476 = vadd.f32 0.0, %v475
        %v477 = vpop.f32.mrf.mxu0
        %478 = vmatprep.mubr.f32.mxu0 0.0
        %479 = vmatmul.mubr.f32.gmra.mxu0 %v365
        %v480 = vpop.f32.mrf.mxu0
        %v481 = vadd.f32 0.0, %v480
        %v482 = vpop.f32.mrf.mxu0
        %483 = vmatprep.mubr.f32.mxu0 0.0
        %484 = vmatmul.mubr.f32.gmra.mxu0 %v368
        %v485 = vpop.f32.mrf.mxu0
        %v486 = vadd.f32 0.0, %v485
        %v487 = vpop.f32.mrf.mxu0
        %488 = vmatprep.mubr.f32.mxu0 0.0
        %489 = vmatmul.mubr.f32.gmra.mxu0 %v371
        %v490 = vpop.f32.mrf.mxu0
        %v491 = vadd.f32 0.0, %v490
        %v492 = vpop.f32.mrf.mxu0
        %493 = vmatprep.mubr.f32.mxu0 0.0
        %494 = vmatmul.mubr.f32.gmra.mxu0 %v374
        %v495 = vpop.f32.mrf.mxu0
        %v496 = vadd.f32 0.0, %v495
        %v497 = vpop.f32.mrf.mxu0
        %498 = vmatprep.mubr.f32.mxu0 0.0
        %499 = vmatmul.mubr.f32.gmra.mxu0 %v377
        %v500 = vpop.f32.mrf.mxu0
        %v501 = vadd.f32 0.0, %v500
        %v502 = vpop.f32.mrf.mxu0
        %503 = vmatprep.mubr.f32.mxu0 0.0
        %504 = vmatmul.mubr.f32.gmra.mxu0 %v380
        %v505 = vpop.f32.mrf.mxu0
        %v506 = vadd.f32 0.0, %v505
        %v507 = vpop.f32.mrf.mxu0
        %508 = vmatprep.mubr.f32.mxu0 0.0
        %509 = vmatmul.mubr.f32.gmra.mxu0 %v383
        %v510 = vpop.f32.mrf.mxu0
        %v511 = vadd.f32 0.0, %v510
        %v512 = vpop.f32.mrf.mxu0
        %513 = vdwg.mxu0
        %v515 = vsel %vm360, %v304, 0
        %v518 = vsel %vm360, %v305, 0
        %v521 = vsel %vm360, %v306, 0
        %v524 = vsel %vm360, %v307, 0
        %v527 = vsel %vm360, %v308, 0
        %v530 = vsel %vm360, %v309, 0
        %v533 = vsel %vm360, %v310, 0
        %v536 = vsel %vm360, %v311, 0
        %v539 = vsel %vm360, %v336, 0
        %v542 = vsel %vm360, %v337, 0
        %v545 = vsel %vm360, %v338, 0
        %v548 = vsel %vm360, %v339, 0
        %v551 = vsel %vm360, %v340, 0
        %v554 = vsel %vm360, %v341, 0
        %v557 = vsel %vm360, %v342, 0
        %v560 = vsel %vm360, %v343, 0
        %562 = vmatprep.subr.mxu0 0.0
        %563 = vmatpush1.xpose.msra.mxu0 0.0
        %564 = vmatprep.subr.mxu0 0.0
        %565 = vmatpush1.xpose.msra.mxu0 0.0
        %566 = vmatprep.subr.mxu0 0.0
        %567 = vmatpush1.xpose.msra.mxu0 0.0
        %568 = vmatprep.subr.mxu0 0.0
        %569 = vmatpush1.xpose.msra.mxu0 0.0
        %570 = vmatprep.subr.mxu0 0.0
        %571 = vmatpush1.xpose.msra.mxu0 0.0
        %572 = vmatprep.subr.mxu0 0.0
        %573 = vmatpush1.xpose.msra.mxu0 0.0
        %574 = vmatprep.subr.mxu0 0.0
        %575 = vmatpush1.xpose.msra.mxu0 0.0
        %576 = vmatprep.subr.mxu0 0.0
        %577 = vmatpush1.xpose.msra.mxu0 0.0
        %578 = vmatprep.subr.mxu0 0.0
        %579 = vmatpush1.xpose.msra.mxu0 %v560
        %580 = vmatprep.subr.mxu0 0.0
        %581 = vmatpush1.xpose.msra.mxu0 %v557
        %582 = vmatprep.subr.mxu0 0.0
        %583 = vmatpush1.xpose.msra.mxu0 %v554
        %584 = vmatprep.subr.mxu0 0.0
        %585 = vmatpush1.xpose.msra.mxu0 %v551
        %586 = vmatprep.subr.mxu0 0.0
        %587 = vmatpush1.xpose.msra.mxu0 %v548
        %588 = vmatprep.subr.mxu0 0.0
        %589 = vmatpush1.xpose.msra.mxu0 %v545
        %590 = vmatprep.subr.mxu0 0.0
        %591 = vmatpush1.xpose.msra.mxu0 %v542
        %592 = vmatprep.subr.mxu0 0.0
        %593 = vmatpush1.xpose.msra.mxu0 %v539
        %594 = vmatprep.subr.mxu0 0.0
        %595 = vmatpush2.xpose.msra.mxu0 0.0
        %596 = vmatprep.subr.mxu0 0.0
        %597 = vmatpush2.xpose.msra.mxu0 0.0
        %598 = vmatprep.subr.mxu0 0.0
        %599 = vmatpush2.xpose.msra.mxu0 0.0
        %600 = vmatprep.subr.mxu0 0.0
        %601 = vmatpush2.xpose.msra.mxu0 0.0
        %602 = vmatprep.subr.mxu0 0.0
        %603 = vmatpush2.xpose.msra.mxu0 0.0
        %604 = vmatprep.subr.mxu0 0.0
        %605 = vmatpush2.xpose.msra.mxu0 0.0
        %606 = vmatprep.subr.mxu0 0.0
        %607 = vmatpush2.xpose.msra.mxu0 0.0
        %608 = vmatprep.subr.mxu0 0.0
        %609 = vmatpush2.xpose.msra.mxu0 0.0
        %610 = vmatprep.subr.mxu0 0.0
        %611 = vmatpush2.xpose.msra.mxu0 0.0
        %612 = vmatprep.subr.mxu0 0.0
        %613 = vmatpush2.xpose.msra.mxu0 0.0
        %614 = vmatprep.subr.mxu0 0.0
        %615 = vmatpush2.xpose.msra.mxu0 0.0
        %616 = vmatprep.subr.mxu0 0.0
        %617 = vmatpush2.xpose.msra.mxu0 0.0
        %618 = vmatprep.subr.mxu0 0.0
        %619 = vmatpush2.xpose.msra.mxu0 0.0
        %620 = vmatprep.subr.mxu0 0.0
        %621 = vmatpush2.xpose.msra.mxu0 0.0
        %622 = vmatprep.subr.mxu0 0.0
        %623 = vmatpush2.xpose.msra.mxu0 0.0
        %624 = vmatprep.subr.mxu0 0.0
        %625 = vmatpush2.xpose.msra.mxu0 0.0
        %626 = vmatprep.mubr.f32.mxu0 0.0
        %627 = vmatmul.mubr.f32.gmra.mxu0 %v515
        %v628 = vpop.f32.mrf.mxu0
        %v629 = vadd.f32 0.0, %v628
        %v630 = vpop.f32.mrf.mxu0
        %631 = vmatprep.mubr.f32.mxu0 0.0
        %632 = vmatmul.mubr.f32.gmra.mxu0 %v518
        %v633 = vpop.f32.mrf.mxu0
        %v634 = vadd.f32 0.0, %v633
        %v635 = vpop.f32.mrf.mxu0
        %636 = vmatprep.mubr.f32.mxu0 0.0
        %637 = vmatmul.mubr.f32.gmra.mxu0 %v521
        %v638 = vpop.f32.mrf.mxu0
        %v639 = vadd.f32 0.0, %v638
        %v640 = vpop.f32.mrf.mxu0
        %641 = vmatprep.mubr.f32.mxu0 0.0
        %642 = vmatmul.mubr.f32.gmra.mxu0 %v524
        %v643 = vpop.f32.mrf.mxu0
        %v644 = vadd.f32 0.0, %v643
        %v645 = vpop.f32.mrf.mxu0
        %646 = vmatprep.mubr.f32.mxu0 0.0
        %647 = vmatmul.mubr.f32.gmra.mxu0 %v527
        %v648 = vpop.f32.mrf.mxu0
        %v649 = vadd.f32 0.0, %v648
        %v650 = vpop.f32.mrf.mxu0
        %651 = vmatprep.mubr.f32.mxu0 0.0
        %652 = vmatmul.mubr.f32.gmra.mxu0 %v530
        %v653 = vpop.f32.mrf.mxu0
        %v654 = vadd.f32 0.0, %v653
        %v655 = vpop.f32.mrf.mxu0
        %656 = vmatprep.mubr.f32.mxu0 0.0
        %657 = vmatmul.mubr.f32.gmra.mxu0 %v533
        %v658 = vpop.f32.mrf.mxu0
        %v659 = vadd.f32 0.0, %v658
        %v660 = vpop.f32.mrf.mxu0
        %661 = vmatprep.mubr.f32.mxu0 0.0
        %662 = vmatmul.mubr.f32.gmra.mxu0 %v536
        %v663 = vpop.f32.mrf.mxu0
        %v664 = vadd.f32 0.0, %v663
        %v665 = vpop.f32.mrf.mxu0
        %666 = vdwg.mxu0
        %v668 = vsel %vm360, %v312, 0
        %v671 = vsel %vm360, %v313, 0
        %v674 = vsel %vm360, %v314, 0
        %v677 = vsel %vm360, %v315, 0
        %v680 = vsel %vm360, %v316, 0
        %v683 = vsel %vm360, %v317, 0
        %v686 = vsel %vm360, %v318, 0
        %v689 = vsel %vm360, %v319, 0
        %v692 = vsel %vm360, %v344, 0
        %v695 = vsel %vm360, %v345, 0
        %v698 = vsel %vm360, %v346, 0
        %v701 = vsel %vm360, %v347, 0
        %v704 = vsel %vm360, %v348, 0
        %v707 = vsel %vm360, %v349, 0
        %v710 = vsel %vm360, %v350, 0
        %v713 = vsel %vm360, %v351, 0
        %715 = vmatprep.subr.mxu0 0.0
        %716 = vmatpush1.xpose.msra.mxu0 0.0
        %717 = vmatprep.subr.mxu0 0.0
        %718 = vmatpush1.xpose.msra.mxu0 0.0
        %719 = vmatprep.subr.mxu0 0.0
        %720 = vmatpush1.xpose.msra.mxu0 0.0
        %721 = vmatprep.subr.mxu0 0.0
        %722 = vmatpush1.xpose.msra.mxu0 0.0
        %723 = vmatprep.subr.mxu0 0.0
        %724 = vmatpush1.xpose.msra.mxu0 0.0
        %725 = vmatprep.subr.mxu0 0.0
        %726 = vmatpush1.xpose.msra.mxu0 0.0
        %727 = vmatprep.subr.mxu0 0.0
        %728 = vmatpush1.xpose.msra.mxu0 0.0
        %729 = vmatprep.subr.mxu0 0.0
        %730 = vmatpush1.xpose.msra.mxu0 0.0
        %731 = vmatprep.subr.mxu0 0.0
        %732 = vmatpush1.xpose.msra.mxu0 %v713
        %733 = vmatprep.subr.mxu0 0.0
        %734 = vmatpush1.xpose.msra.mxu0 %v710
        %735 = vmatprep.subr.mxu0 0.0
        %736 = vmatpush1.xpose.msra.mxu0 %v707
        %737 = vmatprep.subr.mxu0 0.0
        %738 = vmatpush1.xpose.msra.mxu0 %v704
        %739 = vmatprep.subr.mxu0 0.0
        %740 = vmatpush1.xpose.msra.mxu0 %v701
        %741 = vmatprep.subr.mxu0 0.0
        %742 = vmatpush1.xpose.msra.mxu0 %v698
        %743 = vmatprep.subr.mxu0 0.0
        %744 = vmatpush1.xpose.msra.mxu0 %v695
        %745 = vmatprep.subr.mxu0 0.0
        %746 = vmatpush1.xpose.msra.mxu0 %v692
        %747 = vmatprep.subr.mxu0 0.0
        %748 = vmatpush2.xpose.msra.mxu0 0.0
        %749 = vmatprep.subr.mxu0 0.0
        %750 = vmatpush2.xpose.msra.mxu0 0.0
        %751 = vmatprep.subr.mxu0 0.0
        %752 = vmatpush2.xpose.msra.mxu0 0.0
        %753 = vmatprep.subr.mxu0 0.0
        %754 = vmatpush2.xpose.msra.mxu0 0.0
        %755 = vmatprep.subr.mxu0 0.0
        %756 = vmatpush2.xpose.msra.mxu0 0.0
        %757 = vmatprep.subr.mxu0 0.0
        %758 = vmatpush2.xpose.msra.mxu0 0.0
        %759 = vmatprep.subr.mxu0 0.0
        %760 = vmatpush2.xpose.msra.mxu0 0.0
        %761 = vmatprep.subr.mxu0 0.0
        %762 = vmatpush2.xpose.msra.mxu0 0.0
        %763 = vmatprep.subr.mxu0 0.0
        %764 = vmatpush2.xpose.msra.mxu0 0.0
        %765 = vmatprep.subr.mxu0 0.0
        %766 = vmatpush2.xpose.msra.mxu0 0.0
        %767 = vmatprep.subr.mxu0 0.0
        %768 = vmatpush2.xpose.msra.mxu0 0.0
        %769 = vmatprep.subr.mxu0 0.0
        %770 = vmatpush2.xpose.msra.mxu0 0.0
        %771 = vmatprep.subr.mxu0 0.0
        %772 = vmatpush2.xpose.msra.mxu0 0.0
        %773 = vmatprep.subr.mxu0 0.0
        %774 = vmatpush2.xpose.msra.mxu0 0.0
        %775 = vmatprep.subr.mxu0 0.0
        %776 = vmatpush2.xpose.msra.mxu0 0.0
        %777 = vmatprep.subr.mxu0 0.0
        %778 = vmatpush2.xpose.msra.mxu0 0.0
        %779 = vmatprep.mubr.f32.mxu0 0.0
        %780 = vmatmul.mubr.f32.gmra.mxu0 %v668
        %v781 = vpop.f32.mrf.mxu0
        %v782 = vadd.f32 0.0, %v781
        %v783 = vpop.f32.mrf.mxu0
        %784 = vmatprep.mubr.f32.mxu0 0.0
        %785 = vmatmul.mubr.f32.gmra.mxu0 %v671
        %v786 = vpop.f32.mrf.mxu0
        %v787 = vadd.f32 0.0, %v786
        %v788 = vpop.f32.mrf.mxu0
        %789 = vmatprep.mubr.f32.mxu0 0.0
        %790 = vmatmul.mubr.f32.gmra.mxu0 %v674
        %v791 = vpop.f32.mrf.mxu0
        %v792 = vadd.f32 0.0, %v791
        %v793 = vpop.f32.mrf.mxu0
        %794 = vmatprep.mubr.f32.mxu0 0.0
        %795 = vmatmul.mubr.f32.gmra.mxu0 %v677
        %v796 = vpop.f32.mrf.mxu0
        %v797 = vadd.f32 0.0, %v796
        %v798 = vpop.f32.mrf.mxu0
        %799 = vmatprep.mubr.f32.mxu0 0.0
        %800 = vmatmul.mubr.f32.gmra.mxu0 %v680
        %v801 = vpop.f32.mrf.mxu0
        %v802 = vadd.f32 0.0, %v801
        %v803 = vpop.f32.mrf.mxu0
        %804 = vmatprep.mubr.f32.mxu0 0.0
        %805 = vmatmul.mubr.f32.gmra.mxu0 %v683
        %v806 = vpop.f32.mrf.mxu0
        %v807 = vadd.f32 0.0, %v806
        %v808 = vpop.f32.mrf.mxu0
        %809 = vmatprep.mubr.f32.mxu0 0.0
        %810 = vmatmul.mubr.f32.gmra.mxu0 %v686
        %v811 = vpop.f32.mrf.mxu0
        %v812 = vadd.f32 0.0, %v811
        %v813 = vpop.f32.mrf.mxu0
        %814 = vmatprep.mubr.f32.mxu0 0.0
        %815 = vmatmul.mubr.f32.gmra.mxu0 %v689
        %v816 = vpop.f32.mrf.mxu0
        %v817 = vadd.f32 0.0, %v816
        %v818 = vpop.f32.mrf.mxu0
        %819 = vdwg.mxu0
        %v821 = vsel %vm360, %v320, 0
        %v824 = vsel %vm360, %v321, 0
        %v827 = vsel %vm360, %v322, 0
        %v830 = vsel %vm360, %v323, 0
        %v833 = vsel %vm360, %v324, 0
        %v836 = vsel %vm360, %v325, 0
        %v839 = vsel %vm360, %v326, 0
        %v842 = vsel %vm360, %v327, 0
        %v845 = vsel %vm360, %v352, 0
        %v848 = vsel %vm360, %v353, 0
        %v851 = vsel %vm360, %v354, 0
        %v854 = vsel %vm360, %v355, 0
        %v857 = vsel %vm360, %v356, 0
        %v860 = vsel %vm360, %v357, 0
        %v863 = vsel %vm360, %v358, 0
        %v866 = vsel %vm360, %v359, 0
        %868 = vmatprep.subr.mxu0 0.0
        %869 = vmatpush1.xpose.msra.mxu0 0.0
        %870 = vmatprep.subr.mxu0 0.0
        %871 = vmatpush1.xpose.msra.mxu0 0.0
        %872 = vmatprep.subr.mxu0 0.0
        %873 = vmatpush1.xpose.msra.mxu0 0.0
        %874 = vmatprep.subr.mxu0 0.0
        %875 = vmatpush1.xpose.msra.mxu0 0.0
        %876 = vmatprep.subr.mxu0 0.0
        %877 = vmatpush1.xpose.msra.mxu0 0.0
        %878 = vmatprep.subr.mxu0 0.0
        %879 = vmatpush1.xpose.msra.mxu0 0.0
        %880 = vmatprep.subr.mxu0 0.0
        %881 = vmatpush1.xpose.msra.mxu0 0.0
        %882 = vmatprep.subr.mxu0 0.0
        %883 = vmatpush1.xpose.msra.mxu0 0.0
        %884 = vmatprep.subr.mxu0 0.0
        %885 = vmatpush1.xpose.msra.mxu0 %v866
        %886 = vmatprep.subr.mxu0 0.0
        %887 = vmatpush1.xpose.msra.mxu0 %v863
        %888 = vmatprep.subr.mxu0 0.0
        %889 = vmatpush1.xpose.msra.mxu0 %v860
        %890 = vmatprep.subr.mxu0 0.0
        %891 = vmatpush1.xpose.msra.mxu0 %v857
        %892 = vmatprep.subr.mxu0 0.0
        %893 = vmatpush1.xpose.msra.mxu0 %v854
        %894 = vmatprep.subr.mxu0 0.0
        %895 = vmatpush1.xpose.msra.mxu0 %v851
        %896 = vmatprep.subr.mxu0 0.0
        %897 = vmatpush1.xpose.msra.mxu0 %v848
        %898 = vmatprep.subr.mxu0 0.0
        %899 = vmatpush1.xpose.msra.mxu0 %v845
        %900 = vmatprep.subr.mxu0 0.0
        %901 = vmatpush2.xpose.msra.mxu0 0.0
        %902 = vmatprep.subr.mxu0 0.0
        %903 = vmatpush2.xpose.msra.mxu0 0.0
        %904 = vmatprep.subr.mxu0 0.0
        %905 = vmatpush2.xpose.msra.mxu0 0.0
        %906 = vmatprep.subr.mxu0 0.0
        %907 = vmatpush2.xpose.msra.mxu0 0.0
        %908 = vmatprep.subr.mxu0 0.0
        %909 = vmatpush2.xpose.msra.mxu0 0.0
        %910 = vmatprep.subr.mxu0 0.0
        %911 = vmatpush2.xpose.msra.mxu0 0.0
        %912 = vmatprep.subr.mxu0 0.0
        %913 = vmatpush2.xpose.msra.mxu0 0.0
        %914 = vmatprep.subr.mxu0 0.0
        %915 = vmatpush2.xpose.msra.mxu0 0.0
        %916 = vmatprep.subr.mxu0 0.0
        %917 = vmatpush2.xpose.msra.mxu0 0.0
        %918 = vmatprep.subr.mxu0 0.0
        %919 = vmatpush2.xpose.msra.mxu0 0.0
        %920 = vmatprep.subr.mxu0 0.0
        %921 = vmatpush2.xpose.msra.mxu0 0.0
        %922 = vmatprep.subr.mxu0 0.0
        %923 = vmatpush2.xpose.msra.mxu0 0.0
        %924 = vmatprep.subr.mxu0 0.0
        %925 = vmatpush2.xpose.msra.mxu0 0.0
        %926 = vmatprep.subr.mxu0 0.0
        %927 = vmatpush2.xpose.msra.mxu0 0.0
        %928 = vmatprep.subr.mxu0 0.0
        %929 = vmatpush2.xpose.msra.mxu0 0.0
        %930 = vmatprep.subr.mxu0 0.0
        %931 = vmatpush2.xpose.msra.mxu0 0.0
        %932 = vmatprep.mubr.f32.mxu0 0.0
        %933 = vmatmul.mubr.f32.gmra.mxu0 %v821
        %v934 = vpop.f32.mrf.mxu0
        %v935 = vadd.f32 0.0, %v934
        %v936 = vpop.f32.mrf.mxu0
        %937 = vmatprep.mubr.f32.mxu0 0.0
        %938 = vmatmul.mubr.f32.gmra.mxu0 %v824
        %v939 = vpop.f32.mrf.mxu0
        %v940 = vadd.f32 0.0, %v939
        %v941 = vpop.f32.mrf.mxu0
        %942 = vmatprep.mubr.f32.mxu0 0.0
        %943 = vmatmul.mubr.f32.gmra.mxu0 %v827
        %v944 = vpop.f32.mrf.mxu0
        %v945 = vadd.f32 0.0, %v944
        %v946 = vpop.f32.mrf.mxu0
        %947 = vmatprep.mubr.f32.mxu0 0.0
        %948 = vmatmul.mubr.f32.gmra.mxu0 %v830
        %v949 = vpop.f32.mrf.mxu0
        %v950 = vadd.f32 0.0, %v949
        %v951 = vpop.f32.mrf.mxu0
        %952 = vmatprep.mubr.f32.mxu0 0.0
        %953 = vmatmul.mubr.f32.gmra.mxu0 %v833
        %v954 = vpop.f32.mrf.mxu0
        %v955 = vadd.f32 0.0, %v954
        %v956 = vpop.f32.mrf.mxu0
        %957 = vmatprep.mubr.f32.mxu0 0.0
        %958 = vmatmul.mubr.f32.gmra.mxu0 %v836
        %v959 = vpop.f32.mrf.mxu0
        %v960 = vadd.f32 0.0, %v959
        %v961 = vpop.f32.mrf.mxu0
        %962 = vmatprep.mubr.f32.mxu0 0.0
        %963 = vmatmul.mubr.f32.gmra.mxu0 %v839
        %v964 = vpop.f32.mrf.mxu0
        %v965 = vadd.f32 0.0, %v964
        %v966 = vpop.f32.mrf.mxu0
        %967 = vmatprep.mubr.f32.mxu0 0.0
        %968 = vmatmul.mubr.f32.gmra.mxu0 %v842
        %v969 = vpop.f32.mrf.mxu0
        %v970 = vadd.f32 0.0, %v969
        %v971 = vpop.f32.mrf.mxu0
        %972 = vdwg.mxu0
        %v973 = vld [vmem:[%s287] sm:$0xff]
        %v974 = vld [vmem:[%s287 + $0x8] sm:$0xff]
        %v975 = vld [vmem:[%s287 + $0x10] sm:$0xff]
        %v976 = vld [vmem:[%s287 + $0x18] sm:$0xff]
        %v977 = vld [vmem:[%s287 + $0x20] sm:$0xff]
        %v978 = vld [vmem:[%s287 + $0x28] sm:$0xff]
        %v979 = vld [vmem:[%s287 + $0x30] sm:$0xff]
        %v980 = vld [vmem:[%s287 + $0x38] sm:$0xff]
        %v981 = vadd.f32 %v476, %v973
        %v982 = vadd.f32 %v481, %v974
        %v983 = vadd.f32 %v486, %v975
        %v984 = vadd.f32 %v491, %v976
        %v985 = vadd.f32 %v496, %v977
        %v986 = vadd.f32 %v501, %v978
        %v987 = vadd.f32 %v506, %v979
        %v988 = vadd.f32 %v511, %v980
        %v989 = vadd.f32 %v629, %v973
        %v990 = vadd.f32 %v634, %v974
        %v991 = vadd.f32 %v639, %v975
        %v992 = vadd.f32 %v644, %v976
        %v993 = vadd.f32 %v649, %v977
        %v994 = vadd.f32 %v654, %v978
        %v995 = vadd.f32 %v659, %v979
        %v996 = vadd.f32 %v664, %v980
        %v997 = vadd.f32 %v782, %v973
        %v998 = vadd.f32 %v787, %v974
        %v999 = vadd.f32 %v792, %v975
        %v1000 = vadd.f32 %v797, %v976
        %v1001 = vadd.f32 %v802, %v977
        %v1002 = vadd.f32 %v807, %v978
        %v1003 = vadd.f32 %v812, %v979
        %v1004 = vadd.f32 %v817, %v980
        %v1005 = vadd.f32 %v935, %v973
        %v1006 = vadd.f32 %v940, %v974
        %v1007 = vadd.f32 %v945, %v975
        %v1008 = vadd.f32 %v950, %v976
        %v1009 = vadd.f32 %v955, %v977
        %v1010 = vadd.f32 %v960, %v978
        %v1011 = vadd.f32 %v965, %v979
        %v1012 = vadd.f32 %v970, %v980
        %vm1013 = vcmask 523264
        %v1014 = vsel %vm1013, %v981, -inf
        %1015 = vmax.xlane.f32.xlu0 %v1014
        %v1016 = vpop.xlane.xlu0 %1015
        %v1017 = vsel %vm1013, %v982, -inf
        %1018 = vmax.xlane.f32.xlu0 %v1017
        %v1019 = vpop.xlane.xlu0 %1018
        %v1020 = vsel %vm1013, %v983, -inf
        %1021 = vmax.xlane.f32.xlu0 %v1020
        %v1022 = vpop.xlane.xlu0 %1021
        %v1023 = vsel %vm1013, %v984, -inf
        %1024 = vmax.xlane.f32.xlu0 %v1023
        %v1025 = vpop.xlane.xlu0 %1024
        %v1026 = vsel %vm1013, %v985, -inf
        %1027 = vmax.xlane.f32.xlu0 %v1026
        %v1028 = vpop.xlane.xlu0 %1027
        %v1029 = vsel %vm1013, %v986, -inf
        %1030 = vmax.xlane.f32.xlu0 %v1029
        %v1031 = vpop.xlane.xlu0 %1030
        %v1032 = vsel %vm1013, %v987, -inf
        %1033 = vmax.xlane.f32.xlu0 %v1032
        %v1034 = vpop.xlane.xlu0 %1033
        %v1035 = vsel %vm1013, %v988, -inf
        %1036 = vmax.xlane.f32.xlu0 %v1035
        %v1037 = vpop.xlane.xlu0 %1036
        %v1038 = vsel %vm1013, %v989, -inf
        %1039 = vmax.xlane.f32.xlu0 %v1038
        %v1040 = vpop.xlane.xlu0 %1039
        %v1041 = vsel %vm1013, %v990, -inf
        %1042 = vmax.xlane.f32.xlu0 %v1041
        %v1043 = vpop.xlane.xlu0 %1042
        %v1044 = vsel %vm1013, %v991, -inf
        %1045 = vmax.xlane.f32.xlu0 %v1044
        %v1046 = vpop.xlane.xlu0 %1045
        %v1047 = vsel %vm1013, %v992, -inf
        %1048 = vmax.xlane.f32.xlu0 %v1047
        %v1049 = vpop.xlane.xlu0 %1048
        %v1050 = vsel %vm1013, %v993, -inf
        %1051 = vmax.xlane.f32.xlu0 %v1050
        %v1052 = vpop.xlane.xlu0 %1051
        %v1053 = vsel %vm1013, %v994, -inf
        %1054 = vmax.xlane.f32.xlu0 %v1053
        %v1055 = vpop.xlane.xlu0 %1054
        %v1056 = vsel %vm1013, %v995, -inf
        %1057 = vmax.xlane.f32.xlu0 %v1056
        %v1058 = vpop.xlane.xlu0 %1057
        %v1059 = vsel %vm1013, %v996, -inf
        %1060 = vmax.xlane.f32.xlu0 %v1059
        %v1061 = vpop.xlane.xlu0 %1060
        %v1062 = vsel %vm1013, %v997, -inf
        %1063 = vmax.xlane.f32.xlu0 %v1062
        %v1064 = vpop.xlane.xlu0 %1063
        %v1065 = vsel %vm1013, %v998, -inf
        %1066 = vmax.xlane.f32.xlu0 %v1065
        %v1067 = vpop.xlane.xlu0 %1066
        %v1068 = vsel %vm1013, %v999, -inf
        %1069 = vmax.xlane.f32.xlu0 %v1068
        %v1070 = vpop.xlane.xlu0 %1069
        %v1071 = vsel %vm1013, %v1000, -inf
        %1072 = vmax.xlane.f32.xlu0 %v1071
        %v1073 = vpop.xlane.xlu0 %1072
        %v1074 = vsel %vm1013, %v1001, -inf
        %1075 = vmax.xlane.f32.xlu0 %v1074
        %v1076 = vpop.xlane.xlu0 %1075
        %v1077 = vsel %vm1013, %v1002, -inf
        %1078 = vmax.xlane.f32.xlu0 %v1077
        %v1079 = vpop.xlane.xlu0 %1078
        %v1080 = vsel %vm1013, %v1003, -inf
        %1081 = vmax.xlane.f32.xlu0 %v1080
        %v1082 = vpop.xlane.xlu0 %1081
        %v1083 = vsel %vm1013, %v1004, -inf
        %1084 = vmax.xlane.f32.xlu0 %v1083
        %v1085 = vpop.xlane.xlu0 %1084
        %v1086 = vsel %vm1013, %v1005, -inf
        %1087 = vmax.xlane.f32.xlu0 %v1086
        %v1088 = vpop.xlane.xlu0 %1087
        %v1089 = vsel %vm1013, %v1006, -inf
        %1090 = vmax.xlane.f32.xlu0 %v1089
        %v1091 = vpop.xlane.xlu0 %1090
        %v1092 = vsel %vm1013, %v1007, -inf
        %1093 = vmax.xlane.f32.xlu0 %v1092
        %v1094 = vpop.xlane.xlu0 %1093
        %v1095 = vsel %vm1013, %v1008, -inf
        %1096 = vmax.xlane.f32.xlu0 %v1095
        %v1097 = vpop.xlane.xlu0 %1096
        %v1098 = vsel %vm1013, %v1009, -inf
        %1099 = vmax.xlane.f32.xlu0 %v1098
        %v1100 = vpop.xlane.xlu0 %1099
        %v1101 = vsel %vm1013, %v1010, -inf
        %1102 = vmax.xlane.f32.xlu0 %v1101
        %v1103 = vpop.xlane.xlu0 %1102
        %v1104 = vsel %vm1013, %v1011, -inf
        %1105 = vmax.xlane.f32.xlu0 %v1104
        %v1106 = vpop.xlane.xlu0 %1105
        %v1107 = vsel %vm1013, %v1012, -inf
        %1108 = vmax.xlane.f32.xlu0 %v1107
        %v1109 = vpop.xlane.xlu0 %1108
        %v1110 = vld [vmem:[%s283] sm:$0xff]
        %v1111 = vld [vmem:[%s283 + $0x8] sm:$0xff]
        %v1112 = vld [vmem:[%s283 + $0x10] sm:$0xff]
        %v1113 = vld [vmem:[%s283 + $0x18] sm:$0xff]
        %v1114 = vld [vmem:[%s283 + $0x20] sm:$0xff]
        %v1115 = vld [vmem:[%s283 + $0x28] sm:$0xff]
        %v1116 = vld [vmem:[%s283 + $0x30] sm:$0xff]
        %v1117 = vld [vmem:[%s283 + $0x38] sm:$0xff]
        %v1118 = vmul.f32 %v476, %v1110
        %v1119 = vmul.f32 %v481, %v1111
        %v1120 = vmul.f32 %v486, %v1112
        %v1121 = vmul.f32 %v491, %v1113
        %v1122 = vmul.f32 %v496, %v1114
        %v1123 = vmul.f32 %v501, %v1115
        %v1124 = vmul.f32 %v506, %v1116
        %v1125 = vmul.f32 %v511, %v1117
        %v1126 = vmul.f32 %v629, %v1110
        %v1127 = vmul.f32 %v634, %v1111
        %v1128 = vmul.f32 %v639, %v1112
        %v1129 = vmul.f32 %v644, %v1113
        %v1130 = vmul.f32 %v649, %v1114
        %v1131 = vmul.f32 %v654, %v1115
        %v1132 = vmul.f32 %v659, %v1116
        %v1133 = vmul.f32 %v664, %v1117
        %v1134 = vmul.f32 %v782, %v1110
        %v1135 = vmul.f32 %v787, %v1111
        %v1136 = vmul.f32 %v792, %v1112
        %v1137 = vmul.f32 %v797, %v1113
        %v1138 = vmul.f32 %v802, %v1114
        %v1139 = vmul.f32 %v807, %v1115
        %v1140 = vmul.f32 %v812, %v1116
        %v1141 = vmul.f32 %v817, %v1117
        %v1142 = vmul.f32 %v935, %v1110
        %v1143 = vmul.f32 %v940, %v1111
        %v1144 = vmul.f32 %v945, %v1112
        %v1145 = vmul.f32 %v950, %v1113
        %v1146 = vmul.f32 %v955, %v1114
        %v1147 = vmul.f32 %v960, %v1115
        %v1148 = vmul.f32 %v965, %v1116
        %v1149 = vmul.f32 %v970, %v1117
        %v1150 = vsel %vm1013, %v1118, 0.0
        %1151 = vadd.xlane.f32.xlu0 %v1150
        %v1152 = vpop.xlane.xlu0 %1151
        %v1153 = vsel %vm1013, %v1119, 0.0
        %1154 = vadd.xlane.f32.xlu0 %v1153
        %v1155 = vpop.xlane.xlu0 %1154
        %v1156 = vsel %vm1013, %v1120, 0.0
        %1157 = vadd.xlane.f32.xlu0 %v1156
        %v1158 = vpop.xlane.xlu0 %1157
        %v1159 = vsel %vm1013, %v1121, 0.0
        %1160 = vadd.xlane.f32.xlu0 %v1159
        %v1161 = vpop.xlane.xlu0 %1160
        %v1162 = vsel %vm1013, %v1122, 0.0
        %1163 = vadd.xlane.f32.xlu0 %v1162
        %v1164 = vpop.xlane.xlu0 %1163
        %v1165 = vsel %vm1013, %v1123, 0.0
        %1166 = vadd.xlane.f32.xlu0 %v1165
        %v1167 = vpop.xlane.xlu0 %1166
        %v1168 = vsel %vm1013, %v1124, 0.0
        %1169 = vadd.xlane.f32.xlu0 %v1168
        %v1170 = vpop.xlane.xlu0 %1169
        %v1171 = vsel %vm1013, %v1125, 0.0
        %1172 = vadd.xlane.f32.xlu0 %v1171
        %v1173 = vpop.xlane.xlu0 %1172
        %v1174 = vsel %vm1013, %v1126, 0.0
        %1175 = vadd.xlane.f32.xlu0 %v1174
        %v1176 = vpop.xlane.xlu0 %1175
        %v1177 = vsel %vm1013, %v1127, 0.0
        %1178 = vadd.xlane.f32.xlu0 %v1177
        %v1179 = vpop.xlane.xlu0 %1178
        %v1180 = vsel %vm1013, %v1128, 0.0
        %1181 = vadd.xlane.f32.xlu0 %v1180
        %v1182 = vpop.xlane.xlu0 %1181
        %v1183 = vsel %vm1013, %v1129, 0.0
        %1184 = vadd.xlane.f32.xlu0 %v1183
        %v1185 = vpop.xlane.xlu0 %1184
        %v1186 = vsel %vm1013, %v1130, 0.0
        %1187 = vadd.xlane.f32.xlu0 %v1186
        %v1188 = vpop.xlane.xlu0 %1187
        %v1189 = vsel %vm1013, %v1131, 0.0
        %1190 = vadd.xlane.f32.xlu0 %v1189
        %v1191 = vpop.xlane.xlu0 %1190
        %v1192 = vsel %vm1013, %v1132, 0.0
        %1193 = vadd.xlane.f32.xlu0 %v1192
        %v1194 = vpop.xlane.xlu0 %1193
        %v1195 = vsel %vm1013, %v1133, 0.0
        %1196 = vadd.xlane.f32.xlu0 %v1195
        %v1197 = vpop.xlane.xlu0 %1196
        %v1198 = vsel %vm1013, %v1134, 0.0
        %1199 = vadd.xlane.f32.xlu0 %v1198
        %v1200 = vpop.xlane.xlu0 %1199
        %v1201 = vsel %vm1013, %v1135, 0.0
        %1202 = vadd.xlane.f32.xlu0 %v1201
        %v1203 = vpop.xlane.xlu0 %1202
        %v1204 = vsel %vm1013, %v1136, 0.0
        %1205 = vadd.xlane.f32.xlu0 %v1204
        %v1206 = vpop.xlane.xlu0 %1205
        %v1207 = vsel %vm1013, %v1137, 0.0
        %1208 = vadd.xlane.f32.xlu0 %v1207
        %v1209 = vpop.xlane.xlu0 %1208
        %v1210 = vsel %vm1013, %v1138, 0.0
        %1211 = vadd.xlane.f32.xlu0 %v1210
        %v1212 = vpop.xlane.xlu0 %1211
        %v1213 = vsel %vm1013, %v1139, 0.0
        %1214 = vadd.xlane.f32.xlu0 %v1213
        %v1215 = vpop.xlane.xlu0 %1214
        %v1216 = vsel %vm1013, %v1140, 0.0
        %1217 = vadd.xlane.f32.xlu0 %v1216
        %v1218 = vpop.xlane.xlu0 %1217
        %v1219 = vsel %vm1013, %v1141, 0.0
        %1220 = vadd.xlane.f32.xlu0 %v1219
        %v1221 = vpop.xlane.xlu0 %1220
        %v1222 = vsel %vm1013, %v1142, 0.0
        %1223 = vadd.xlane.f32.xlu0 %v1222
        %v1224 = vpop.xlane.xlu0 %1223
        %v1225 = vsel %vm1013, %v1143, 0.0
        %1226 = vadd.xlane.f32.xlu0 %v1225
        %v1227 = vpop.xlane.xlu0 %1226
        %v1228 = vsel %vm1013, %v1144, 0.0
        %1229 = vadd.xlane.f32.xlu0 %v1228
        %v1230 = vpop.xlane.xlu0 %1229
        %v1231 = vsel %vm1013, %v1145, 0.0
        %1232 = vadd.xlane.f32.xlu0 %v1231
        %v1233 = vpop.xlane.xlu0 %1232
        %v1234 = vsel %vm1013, %v1146, 0.0
        %1235 = vadd.xlane.f32.xlu0 %v1234
        %v1236 = vpop.xlane.xlu0 %1235
        %v1237 = vsel %vm1013, %v1147, 0.0
        %1238 = vadd.xlane.f32.xlu0 %v1237
        %v1239 = vpop.xlane.xlu0 %1238
        %v1240 = vsel %vm1013, %v1148, 0.0
        %1241 = vadd.xlane.f32.xlu0 %v1240
        %v1242 = vpop.xlane.xlu0 %1241
        %v1243 = vsel %vm1013, %v1149, 0.0
        %1244 = vadd.xlane.f32.xlu0 %v1243
        %v1245 = vpop.xlane.xlu0 %1244
        %v1246 = vld [vmem:[#allocation2] sm:$0xf]
        %v1279 = vlaneseq
        %v1280 = vand.u32 %v1279, 127
        %v1281 = vlaneseq
        %v1282 = vshrl.u32 %v1281, 7
        %v1283 = vsub.s32 %v1280, %v1282
        %v1284 = vrot.slane %v1016, %v1283
        %v1285 = vadd.s32 %v1280, 4294967288
        %v1286 = vlaneseq
        %v1287 = vshrl.u32 %v1286, 7
        %v1288 = vsub.s32 %v1285, %v1287
        %v1289 = vrot.slane %v1019, %v1288
        %vm1290 = vcmask 130112
        %v1291 = vsel %vm1290, %v1289, %v1284
        %v1292 = vadd.s32 %v1280, 4294967280
        %v1293 = vlaneseq
        %v1294 = vshrl.u32 %v1293, 7
        %v1295 = vsub.s32 %v1292, %v1294
        %v1296 = vrot.slane %v1022, %v1295
        %vm1297 = vcmask 195712
        %v1298 = vsel %vm1297, %v1296, %v1291
        %v1299 = vadd.s32 %v1280, 4294967272
        %v1300 = vlaneseq
        %v1301 = vshrl.u32 %v1300, 7
        %v1302 = vsub.s32 %v1299, %v1301
        %v1303 = vrot.slane %v1025, %v1302
        %vm1304 = vcmask 261312
        %v1305 = vsel %vm1304, %v1303, %v1298
        %v1306 = vadd.s32 %v1280, 4294967264
        %v1307 = vlaneseq
        %v1308 = vshrl.u32 %v1307, 7
        %v1309 = vsub.s32 %v1306, %v1308
        %v1310 = vrot.slane %v1028, %v1309
        %vm1311 = vcmask 326912
        %v1312 = vsel %vm1311, %v1310, %v1305
        %v1313 = vadd.s32 %v1280, 4294967256
        %v1314 = vlaneseq
        %v1315 = vshrl.u32 %v1314, 7
        %v1316 = vsub.s32 %v1313, %v1315
        %v1317 = vrot.slane %v1031, %v1316
        %vm1318 = vcmask 392512
        %v1319 = vsel %vm1318, %v1317, %v1312
        %v1320 = vadd.s32 %v1280, 4294967248
        %v1321 = vlaneseq
        %v1322 = vshrl.u32 %v1321, 7
        %v1323 = vsub.s32 %v1320, %v1322
        %v1324 = vrot.slane %v1034, %v1323
        %vm1325 = vcmask 458112
        %v1326 = vsel %vm1325, %v1324, %v1319
        %v1327 = vadd.s32 %v1280, 4294967240
        %v1328 = vlaneseq
        %v1329 = vshrl.u32 %v1328, 7
        %v1330 = vsub.s32 %v1327, %v1329
        %v1331 = vrot.slane %v1037, %v1330
        %vm1332 = vcmask 523712
        %v1333 = vsel %vm1332, %v1331, %v1326
        %v1334 = vlaneseq
        %v1335 = vshrl.u32 %v1334, 7
        %v1336 = vsub.s32 %v1280, %v1335
        %v1337 = vrot.slane %v1040, %v1336
        %v1338 = vlaneseq
        %v1339 = vshrl.u32 %v1338, 7
        %v1340 = vsub.s32 %v1285, %v1339
        %v1341 = vrot.slane %v1043, %v1340
        %v1342 = vsel %vm1290, %v1341, %v1337
        %v1343 = vlaneseq
        %v1344 = vshrl.u32 %v1343, 7
        %v1345 = vsub.s32 %v1292, %v1344
        %v1346 = vrot.slane %v1046, %v1345
        %v1347 = vsel %vm1297, %v1346, %v1342
        %v1348 = vlaneseq
        %v1349 = vshrl.u32 %v1348, 7
        %v1350 = vsub.s32 %v1299, %v1349
        %v1351 = vrot.slane %v1049, %v1350
        %v1352 = vsel %vm1304, %v1351, %v1347
        %v1353 = vlaneseq
        %v1354 = vshrl.u32 %v1353, 7
        %v1355 = vsub.s32 %v1306, %v1354
        %v1356 = vrot.slane %v1052, %v1355
        %v1357 = vsel %vm1311, %v1356, %v1352
        %v1358 = vlaneseq
        %v1359 = vshrl.u32 %v1358, 7
        %v1360 = vsub.s32 %v1313, %v1359
        %v1361 = vrot.slane %v1055, %v1360
        %v1362 = vsel %vm1318, %v1361, %v1357
        %v1363 = vlaneseq
        %v1364 = vshrl.u32 %v1363, 7
        %v1365 = vsub.s32 %v1320, %v1364
        %v1366 = vrot.slane %v1058, %v1365
        %v1367 = vsel %vm1325, %v1366, %v1362
        %v1368 = vlaneseq
        %v1369 = vshrl.u32 %v1368, 7
        %v1370 = vsub.s32 %v1327, %v1369
        %v1371 = vrot.slane %v1061, %v1370
        %v1372 = vsel %vm1332, %v1371, %v1367
        %v1373 = vlaneseq
        %v1374 = vshrl.u32 %v1373, 7
        %v1375 = vsub.s32 %v1280, %v1374
        %v1376 = vrot.slane %v1064, %v1375
        %v1377 = vlaneseq
        %v1378 = vshrl.u32 %v1377, 7
        %v1379 = vsub.s32 %v1285, %v1378
        %v1380 = vrot.slane %v1067, %v1379
        %v1381 = vsel %vm1290, %v1380, %v1376
        %v1382 = vlaneseq
        %v1383 = vshrl.u32 %v1382, 7
        %v1384 = vsub.s32 %v1292, %v1383
        %v1385 = vrot.slane %v1070, %v1384
        %v1386 = vsel %vm1297, %v1385, %v1381
        %v1387 = vlaneseq
        %v1388 = vshrl.u32 %v1387, 7
        %v1389 = vsub.s32 %v1299, %v1388
        %v1390 = vrot.slane %v1073, %v1389
        %v1391 = vsel %vm1304, %v1390, %v1386
        %v1392 = vlaneseq
        %v1393 = vshrl.u32 %v1392, 7
        %v1394 = vsub.s32 %v1306, %v1393
        %v1395 = vrot.slane %v1076, %v1394
        %v1396 = vsel %vm1311, %v1395, %v1391
        %v1397 = vlaneseq
        %v1398 = vshrl.u32 %v1397, 7
        %v1399 = vsub.s32 %v1313, %v1398
        %v1400 = vrot.slane %v1079, %v1399
        %v1401 = vsel %vm1318, %v1400, %v1396
        %v1402 = vlaneseq
        %v1403 = vshrl.u32 %v1402, 7
        %v1404 = vsub.s32 %v1320, %v1403
        %v1405 = vrot.slane %v1082, %v1404
        %v1406 = vsel %vm1325, %v1405, %v1401
        %v1407 = vlaneseq
        %v1408 = vshrl.u32 %v1407, 7
        %v1409 = vsub.s32 %v1327, %v1408
        %v1410 = vrot.slane %v1085, %v1409
        %v1411 = vsel %vm1332, %v1410, %v1406
        %v1412 = vlaneseq
        %v1413 = vshrl.u32 %v1412, 7
        %v1414 = vsub.s32 %v1280, %v1413
        %v1415 = vrot.slane %v1088, %v1414
        %v1416 = vlaneseq
        %v1417 = vshrl.u32 %v1416, 7
        %v1418 = vsub.s32 %v1285, %v1417
        %v1419 = vrot.slane %v1091, %v1418
        %v1420 = vsel %vm1290, %v1419, %v1415
        %v1421 = vlaneseq
        %v1422 = vshrl.u32 %v1421, 7
        %v1423 = vsub.s32 %v1292, %v1422
        %v1424 = vrot.slane %v1094, %v1423
        %v1425 = vsel %vm1297, %v1424, %v1420
        %v1426 = vlaneseq
        %v1427 = vshrl.u32 %v1426, 7
        %v1428 = vsub.s32 %v1299, %v1427
        %v1429 = vrot.slane %v1097, %v1428
        %v1430 = vsel %vm1304, %v1429, %v1425
        %v1431 = vlaneseq
        %v1432 = vshrl.u32 %v1431, 7
        %v1433 = vsub.s32 %v1306, %v1432
        %v1434 = vrot.slane %v1100, %v1433
        %v1435 = vsel %vm1311, %v1434, %v1430
        %v1436 = vlaneseq
        %v1437 = vshrl.u32 %v1436, 7
        %v1438 = vsub.s32 %v1313, %v1437
        %v1439 = vrot.slane %v1103, %v1438
        %v1440 = vsel %vm1318, %v1439, %v1435
        %v1441 = vlaneseq
        %v1442 = vshrl.u32 %v1441, 7
        %v1443 = vsub.s32 %v1320, %v1442
        %v1444 = vrot.slane %v1106, %v1443
        %v1445 = vsel %vm1325, %v1444, %v1440
        %v1446 = vlaneseq
        %v1447 = vshrl.u32 %v1446, 7
        %v1448 = vsub.s32 %v1327, %v1447
        %v1449 = vrot.slane %v1109, %v1448
        %v1450 = vsel %vm1332, %v1449, %v1445
        %vm1451 = vcmask 1041409
        %v1452 = vsel %vm1451, %v1372, %v1333
        %vm1453 = vcmask 1042434
        %v1454 = vsel %vm1453, %v1411, %v1452
        %vm1455 = vcmask 1043459
        %v1456 = vsel %vm1455, %v1450, %v1454
        %v1458 = vmax.f32 %v1246, %v1456
        %vm1459 = vcmask 519168
        %1460 = vst.msk [vmem:[#allocation2] sm:$0xf] %vm1459, %v1458
        %v1461 = vld [vmem:[#allocation3] sm:$0xf]
        %v1494 = vlaneseq
        %v1495 = vshrl.u32 %v1494, 7
        %v1496 = vsub.s32 %v1280, %v1495
        %v1497 = vrot.slane %v1152, %v1496
        %v1498 = vlaneseq
        %v1499 = vshrl.u32 %v1498, 7
        %v1500 = vsub.s32 %v1285, %v1499
        %v1501 = vrot.slane %v1155, %v1500
        %v1502 = vsel %vm1290, %v1501, %v1497
        %v1503 = vlaneseq
        %v1504 = vshrl.u32 %v1503, 7
        %v1505 = vsub.s32 %v1292, %v1504
        %v1506 = vrot.slane %v1158, %v1505
        %v1507 = vsel %vm1297, %v1506, %v1502
        %v1508 = vlaneseq
        %v1509 = vshrl.u32 %v1508, 7
        %v1510 = vsub.s32 %v1299, %v1509
        %v1511 = vrot.slane %v1161, %v1510
        %v1512 = vsel %vm1304, %v1511, %v1507
        %v1513 = vlaneseq
        %v1514 = vshrl.u32 %v1513, 7
        %v1515 = vsub.s32 %v1306, %v1514
        %v1516 = vrot.slane %v1164, %v1515
        %v1517 = vsel %vm1311, %v1516, %v1512
        %v1518 = vlaneseq
        %v1519 = vshrl.u32 %v1518, 7
        %v1520 = vsub.s32 %v1313, %v1519
        %v1521 = vrot.slane %v1167, %v1520
        %v1522 = vsel %vm1318, %v1521, %v1517
        %v1523 = vlaneseq
        %v1524 = vshrl.u32 %v1523, 7
        %v1525 = vsub.s32 %v1320, %v1524
        %v1526 = vrot.slane %v1170, %v1525
        %v1527 = vsel %vm1325, %v1526, %v1522
        %v1528 = vlaneseq
        %v1529 = vshrl.u32 %v1528, 7
        %v1530 = vsub.s32 %v1327, %v1529
        %v1531 = vrot.slane %v1173, %v1530
        %v1532 = vsel %vm1332, %v1531, %v1527
        %v1533 = vlaneseq
        %v1534 = vshrl.u32 %v1533, 7
        %v1535 = vsub.s32 %v1280, %v1534
        %v1536 = vrot.slane %v1176, %v1535
        %v1537 = vlaneseq
        %v1538 = vshrl.u32 %v1537, 7
        %v1539 = vsub.s32 %v1285, %v1538
        %v1540 = vrot.slane %v1179, %v1539
        %v1541 = vsel %vm1290, %v1540, %v1536
        %v1542 = vlaneseq
        %v1543 = vshrl.u32 %v1542, 7
        %v1544 = vsub.s32 %v1292, %v1543
        %v1545 = vrot.slane %v1182, %v1544
        %v1546 = vsel %vm1297, %v1545, %v1541
        %v1547 = vlaneseq
        %v1548 = vshrl.u32 %v1547, 7
        %v1549 = vsub.s32 %v1299, %v1548
        %v1550 = vrot.slane %v1185, %v1549
        %v1551 = vsel %vm1304, %v1550, %v1546
        %v1552 = vlaneseq
        %v1553 = vshrl.u32 %v1552, 7
        %v1554 = vsub.s32 %v1306, %v1553
        %v1555 = vrot.slane %v1188, %v1554
        %v1556 = vsel %vm1311, %v1555, %v1551
        %v1557 = vlaneseq
        %v1558 = vshrl.u32 %v1557, 7
        %v1559 = vsub.s32 %v1313, %v1558
        %v1560 = vrot.slane %v1191, %v1559
        %v1561 = vsel %vm1318, %v1560, %v1556
        %v1562 = vlaneseq
        %v1563 = vshrl.u32 %v1562, 7
        %v1564 = vsub.s32 %v1320, %v1563
        %v1565 = vrot.slane %v1194, %v1564
        %v1566 = vsel %vm1325, %v1565, %v1561
        %v1567 = vlaneseq
        %v1568 = vshrl.u32 %v1567, 7
        %v1569 = vsub.s32 %v1327, %v1568
        %v1570 = vrot.slane %v1197, %v1569
        %v1571 = vsel %vm1332, %v1570, %v1566
        %v1572 = vlaneseq
        %v1573 = vshrl.u32 %v1572, 7
        %v1574 = vsub.s32 %v1280, %v1573
        %v1575 = vrot.slane %v1200, %v1574
        %v1576 = vlaneseq
        %v1577 = vshrl.u32 %v1576, 7
        %v1578 = vsub.s32 %v1285, %v1577
        %v1579 = vrot.slane %v1203, %v1578
        %v1580 = vsel %vm1290, %v1579, %v1575
        %v1581 = vlaneseq
        %v1582 = vshrl.u32 %v1581, 7
        %v1583 = vsub.s32 %v1292, %v1582
        %v1584 = vrot.slane %v1206, %v1583
        %v1585 = vsel %vm1297, %v1584, %v1580
        %v1586 = vlaneseq
        %v1587 = vshrl.u32 %v1586, 7
        %v1588 = vsub.s32 %v1299, %v1587
        %v1589 = vrot.slane %v1209, %v1588
        %v1590 = vsel %vm1304, %v1589, %v1585
        %v1591 = vlaneseq
        %v1592 = vshrl.u32 %v1591, 7
        %v1593 = vsub.s32 %v1306, %v1592
        %v1594 = vrot.slane %v1212, %v1593
        %v1595 = vsel %vm1311, %v1594, %v1590
        %v1596 = vlaneseq
        %v1597 = vshrl.u32 %v1596, 7
        %v1598 = vsub.s32 %v1313, %v1597
        %v1599 = vrot.slane %v1215, %v1598
        %v1600 = vsel %vm1318, %v1599, %v1595
        %v1601 = vlaneseq
        %v1602 = vshrl.u32 %v1601, 7
        %v1603 = vsub.s32 %v1320, %v1602
        %v1604 = vrot.slane %v1218, %v1603
        %v1605 = vsel %vm1325, %v1604, %v1600
        %v1606 = vlaneseq
        %v1607 = vshrl.u32 %v1606, 7
        %v1608 = vsub.s32 %v1327, %v1607
        %v1609 = vrot.slane %v1221, %v1608
        %v1610 = vsel %vm1332, %v1609, %v1605
        %v1611 = vlaneseq
        %v1612 = vshrl.u32 %v1611, 7
        %v1613 = vsub.s32 %v1280, %v1612
        %v1614 = vrot.slane %v1224, %v1613
        %v1615 = vlaneseq
        %v1616 = vshrl.u32 %v1615, 7
        %v1617 = vsub.s32 %v1285, %v1616
        %v1618 = vrot.slane %v1227, %v1617
        %v1619 = vsel %vm1290, %v1618, %v1614
        %v1620 = vlaneseq
        %v1621 = vshrl.u32 %v1620, 7
        %v1622 = vsub.s32 %v1292, %v1621
        %v1623 = vrot.slane %v1230, %v1622
        %v1624 = vsel %vm1297, %v1623, %v1619
        %v1625 = vlaneseq
        %v1626 = vshrl.u32 %v1625, 7
        %v1627 = vsub.s32 %v1299, %v1626
        %v1628 = vrot.slane %v1233, %v1627
        %v1629 = vsel %vm1304, %v1628, %v1624
        %v1630 = vlaneseq
        %v1631 = vshrl.u32 %v1630, 7
        %v1632 = vsub.s32 %v1306, %v1631
        %v1633 = vrot.slane %v1236, %v1632
        %v1634 = vsel %vm1311, %v1633, %v1629
        %v1635 = vlaneseq
        %v1636 = vshrl.u32 %v1635, 7
        %v1637 = vsub.s32 %v1313, %v1636
        %v1638 = vrot.slane %v1239, %v1637
        %v1639 = vsel %vm1318, %v1638, %v1634
        %v1640 = vlaneseq
        %v1641 = vshrl.u32 %v1640, 7
        %v1642 = vsub.s32 %v1320, %v1641
        %v1643 = vrot.slane %v1242, %v1642
        %v1644 = vsel %vm1325, %v1643, %v1639
        %v1645 = vlaneseq
        %v1646 = vshrl.u32 %v1645, 7
        %v1647 = vsub.s32 %v1327, %v1646
        %v1648 = vrot.slane %v1245, %v1647
        %v1649 = vsel %vm1332, %v1648, %v1644
        %v1650 = vsel %vm1451, %v1571, %v1532
        %v1651 = vsel %vm1453, %v1610, %v1650
        %v1652 = vsel %vm1455, %v1649, %v1651
        %v1654 = vadd.f32 %v1461, %v1652
        %1655 = vst.msk [vmem:[#allocation3] sm:$0xf] %vm1459, %v1654
        // Predicated region
        $region41: #{tpu_custom_call.1} parent=35 // pred_check
          %p1656 = pneg %p289
        $region42: #{tpu_custom_call.1} parent=35 // pred_check_branch
          %1658 = sbr.rel (%p1656) target = $region44
        $region43: #{tpu_custom_call.1} parent=35 // pred_region
          %v1659 = vld [vmem:[#allocation2] sm:$0xf]
          %v1660 = vld [vmem:[#allocation3] sm:$0xf]
          %v1661 = vmul.f32 %v1660, 0.04
          %v1662 = vsub.f32 %v1659, %v1661
          %v1665 = vunpack.c.l.s4 1966171168
          %v1666 = vunpack.c.0.s8 %v1665
          %v1667 = vlaneseq
          %v1668 = vshrl.u32 %v1667, 7
          %v1669 = vsub.s32 %v1666, %v1668
          %v1670 = vrot.slane %v1662, %v1669
          %v1671 = vcombine.high %v1670, %v1670
          %v1673 = vunpack.c.l.s4 1966171168
          %v1674 = vunpack.c.0.s8 %v1673
          %v1675 = vlaneseq
          %v1676 = vshrl.u32 %v1675, 7
          %v1677 = vsub.s32 %v1674, %v1676
          %v1678 = vrot.slane %v1670, %v1677
          %v1680 = vunpack.c.l.s4 1966171168
          %v1681 = vunpack.c.0.s8 %v1680
          %v1682 = vlaneseq
          %v1683 = vshrl.u32 %v1682, 7
          %v1684 = vsub.s32 %v1681, %v1683
          %v1685 = vrot.slane %v1671, %v1684
          %v1686 = vcombine.high %v1678, %v1678
          %v1687 = vcombine.high %v1685, %v1685
          %vm1692 = vcmask 516096
          %1693 = vst.msk [vmem:[%s260] sm:$0x1] %vm1692, %v1678
          %1694 = vst.msk [vmem:[%s260 + $0x1] sm:$0x1] %vm1692, %v1685
          %1695 = vst.msk [vmem:[%s260 + $0x2] sm:$0x1] %vm1692, %v1686
          %1696 = vst.msk [vmem:[%s260 + $0x3] sm:$0x1] %vm1692, %v1687
        $region44: #{tpu_custom_call.1} parent=35 // pred_fallthru
          _
        %s1697 = sand.u32 %s144, 1
        %s1698 = scalar_lea.sflag [#allocation5], %s1697
        %s1699 = sand.u32 %s144, 1
        %s1700 = smul.addr %s1699, 4
        %s1701 = scalar_lea.vmem [#allocation4], %s1700
        // Predicated region
        $region45: #{tpu_custom_call.1} parent=35 // pred_check
          %p1702 = pneg %p154
        $region46: #{tpu_custom_call.1} parent=35 // pred_check_branch
          %1704 = sbr.rel (%p1702) target = $region48
        $region47: #{tpu_custom_call.1} parent=35 // pred_region
          %s1705 = smul.u32 4, %s22
          %s1707 = ssub.s32 64, 64
          %1708 = vsyncadd %s1698, %s1707
          %s1709 = smul.addr %s1705, 16
          %s1710 = scalar_lea.hbm %s4, %s1709
          %s1711 = sshll.u32 %s1701, 4
          %s1712 = int_to_ptr.vmem [resolvable:$true] %s1711
          %1717 = dma.vmem_to_hbm [thread:$0]  %s1712, 64, %s1710, %s1698, 16, 16, 1
        $region48: #{tpu_custom_call.1} parent=35 // pred_fallthru
          _
      $region36: #{tpu_custom_call.1} parent=5 // pred_fallthru
        _
      %p1718 = scmp.le.s32.totalorder 2, %s13
      // Predicated region
      $region49: #{tpu_custom_call.1} parent=5 // pred_check
        %p1719 = pneg %p1718
      $region50: #{tpu_custom_call.1} parent=5 // pred_check_branch
        %1721 = sbr.rel (%p1719) target = $region52
      $region51: #{tpu_custom_call.1} parent=5 // pred_region
        %s1722 = ssub.s32 %s13, 2
        // Predicated region
        $region53: #{tpu_custom_call.1} parent=51 // pred_check
          %p1723 = pneg %p160
        $region54: #{tpu_custom_call.1} parent=51 // pred_check_branch
          %1725 = sbr.rel (%p1723) target = $region56
        $region55: #{tpu_custom_call.1} parent=51 // pred_region
          %s1726 = sand.u32 %s145, 1
          %s1727 = scalar_lea.sflag [#allocation5], %s1726
          %s1728 = sand.u32 %s145, 1
          %s1729 = smul.addr %s1728, 4
          %s1730 = scalar_lea.vmem [#allocation4], %s1729
          %1731 = dma.done %s1727, 64
        $region56: #{tpu_custom_call.1} parent=51 // pred_fallthru
          _
      $region52: #{tpu_custom_call.1} parent=5 // pred_fallthru
        _
    $region6: #{tpu_custom_call.1} parent=1 // loop_footer
      %s17 = sadd.s32 1, %s13
    $region7: #{tpu_custom_call.1} parent=1 // loop_footer_branch
      %12 = sbr.rel target = $region3
    $region8: #{tpu_custom_call.1} parent=1 // loop_exit
      _
    %1732 = vsyncpa [#allocation5], 1
    %s1733 = scalar_lea.sflag [#allocation5], 1
    %1734 = vsyncpa %s1733, 1

</llo_original>
